<compile_context>
chip_gen: v7x
topology: tpu7x:2x2x1
jax: 0.10.0
libtpu: 0.0.40
codegen_flags: <defaults>
</compile_context>

<pallas_src>
import jax
import jax.numpy as jnp
from jax.experimental import pallas as pl
from jax.experimental.pallas import tpu as pltpu

# Model hyper-parameters (small, consistent with the forward's semantics).
B, S, D = 2, 8, 32        # batch, seq, hidden
H, HD = 2, 16             # heads, head_dim (H * HD == D)
F = 64                    # FFN hidden
L = 2                     # number of transformer layers
V = 100                   # vocab size
PAD_ID = 0
EPS = 1e-5
N = B * S                 # tokens processed per kernel invocation


def _layernorm(x, g, b):
    # f32 statistics (v5e has no bf16 VPU/EUP path).
    mu = jnp.mean(x, axis=-1, keepdims=True)
    var = jnp.mean(jnp.square(x - mu), axis=-1, keepdims=True)
    return (x - mu) * jax.lax.rsqrt(var + EPS) * g + b


def _encoder_stack(x, bias, ln1g_ref, ln1b_ref, wqkv_ref, wo_ref,
                   ln2g_ref, ln2b_ref, w1_ref, w2_ref, lnfg_ref, lnfb_ref):
    """Runs all L transformer layers on x: [N, D] f32. All weights stay in VMEM."""
    scale = 1.0 / (HD ** 0.5)
    for l in range(L):                               # static layer loop (fully fused)
        # ---- pre-LN multi-head self-attention ----
        h = _layernorm(x, ln1g_ref[l], ln1b_ref[l])                       # [N, D] f32
        qkv = jnp.dot(h.astype(jnp.bfloat16), wqkv_ref[l],
                      preferred_element_type=jnp.float32)                 # [N, 3D] f32
        q = qkv[:, 0 * D:1 * D] * scale
        k = qkv[:, 1 * D:2 * D]
        v = qkv[:, 2 * D:3 * D].astype(jnp.bfloat16)

        attn_out = jnp.zeros((N, D), jnp.float32)
        for hh in range(H):                          # static head loop; Wo folded in
            sl = slice(hh * HD, (hh + 1) * HD)
            # s = q_h @ k_h^T over the whole folded batch: one [N, N] MXU op.
            s = jax.lax.dot_general(
                q[:, sl].astype(jnp.bfloat16), k[:, sl].astype(jnp.bfloat16),
                (((1,), (1,)), ((), ())), preferred_element_type=jnp.float32)
            s = s + bias                             # block-diag batch + pad-key mask
            m = jnp.max(s, axis=-1, keepdims=True)
            p = jnp.exp(s - m)
            p = p * pl.reciprocal(jnp.sum(p, axis=-1, keepdims=True), approx=True)
            ctx = jnp.dot(p.astype(jnp.bfloat16), v[:, sl],
                          preferred_element_type=jnp.float32)             # [N, HD]
            attn_out = attn_out + jnp.dot(ctx.astype(jnp.bfloat16), wo_ref[l, hh],
                                          preferred_element_type=jnp.float32)
        x = x + attn_out

        # ---- pre-LN GELU MLP ----
        h2 = _layernorm(x, ln2g_ref[l], ln2b_ref[l])
        u = jnp.dot(h2.astype(jnp.bfloat16), w1_ref[l],
                    preferred_element_type=jnp.float32)                   # [N, F]
        # TODO(synk): HF configs using exact (erf) GELU differ slightly from tanh approx.
        u = jax.nn.gelu(u, approximate=True)
        x = x + jnp.dot(u.astype(jnp.bfloat16), w2_ref[l],
                        preferred_element_type=jnp.float32)

    # Final LayerNorm (HF encoders normalize the exposed last hidden state).
    return _layernorm(x, lnfg_ref[...], lnfb_ref[...])


def encode_ids_kernel(ids_ref, bias_ref, emb_ref,
                      ln1g_ref, ln1b_ref, wqkv_ref, wo_ref,
                      ln2g_ref, ln2b_ref, w1_ref, w2_ref,
                      lnfg_ref, lnfb_ref, out_ref):
    """input_ids path: embedding + mask + all layers + CLS slice, one kernel."""
    ids_col = ids_ref[...]                                        # [N, 1] int32
    # Embedding lookup as a one-hot matmul on the MXU (no in-kernel gather).
    vocab_iota = jax.lax.broadcasted_iota(jnp.int32, (N, V), 1)
    one_hot = (ids_col == vocab_iota).astype(jnp.bfloat16)        # [N, V]
    x = jnp.dot(one_hot, emb_ref[...], preferred_element_type=jnp.float32)  # [N, D]

    x = _encoder_stack(x, bias_ref[...], ln1g_ref, ln1b_ref, wqkv_ref, wo_ref,
                       ln2g_ref, ln2b_ref, w1_ref, w2_ref, lnfg_ref, lnfb_ref)

    # hidden_states[-1][:, 0, :] -> token 0 of each batch row.
    for b in range(B):
        out_ref[pl.ds(b, 1), :] = x[b * S:b * S + 1, :]


def encode_embeds_kernel(x0_ref, bias_ref,
                         ln1g_ref, ln1b_ref, wqkv_ref, wo_ref,
                         ln2g_ref, ln2b_ref, w1_ref, w2_ref,
                         lnfg_ref, lnfb_ref, out_ref):
    """inputs_embeds path (no attention mask -> all tokens valid)."""
    x = x0_ref[...]                                               # [N, D] f32
    x = _encoder_stack(x, bias_ref[...], ln1g_ref, ln1b_ref, wqkv_ref, wo_ref,
                       ln2g_ref, ln2b_ref, w1_ref, w2_ref, lnfg_ref, lnfb_ref)
    for b in range(B):
        out_ref[pl.ds(b, 1), :] = x[b * S:b * S + 1, :]


_VMEM_SPEC = pl.BlockSpec(memory_space=pltpu.MemorySpace.VMEM)


def _call_encoder(kernel, inputs):
    # Single invocation, no grid: everything fits in VMEM with huge headroom
    # (weights ~70 KiB, activations ~4 KiB), even against v7x's 64 MiB.
    # NOTE: on v7x a 2-way "parallel" batch split could use both TensorCores,
    # but at this size launch overhead dominates, so one block is kept.
    return pl.pallas_call(
        kernel,
        out_shape=jax.ShapeDtypeStruct((B, D), jnp.float32),
        in_specs=[_VMEM_SPEC] * len(inputs),
        out_specs=_VMEM_SPEC,
        compiler_params=pltpu.CompilerParams(vmem_limit_bytes=32 * 1024 * 1024),
    )(*inputs)


def _build_attn_bias(valid):
    """Additive attention bias over the batch-folded token axis.

    valid: [B, S] bool (True = real token).  Returns [N, N] f32 with 0 where
    query and key belong to the same batch element AND the key is a real
    token, -1e9 elsewhere (folds the per-batch attention and pad-key masking
    into a single score matrix).  Pad *query* rows are left unmasked — their
    outputs are never read (only token 0 is returned), matching the module.
    """
    batch_q = (jnp.arange(N) // S)[:, None]
    batch_k = (jnp.arange(N) // S)[None, :]
    key_ok = valid.reshape(1, N)
    allowed = (batch_q == batch_k) & key_ok
    return jnp.where(allowed, 0.0, -1e9).astype(jnp.float32)


def init_params(key):
    keys = jax.random.split(key, 5)

    def w(k, shape):
        # Store matmul weights in bf16 (native MXU dtype); accumulate in f32.
        return (0.02 * jax.random.normal(k, shape, jnp.float32)).astype(jnp.bfloat16)

    return {
        "emb":  w(keys[0], (V, D)),
        "ln1g": jnp.ones((L, 1, D), jnp.float32),
        "ln1b": jnp.zeros((L, 1, D), jnp.float32),
        "wqkv": w(keys[1], (L, D, 3 * D)),
        "wo":   w(keys[2], (L, H, HD, D)),      # per-head output proj (no concat)
        "ln2g": jnp.ones((L, 1, D), jnp.float32),
        "ln2b": jnp.zeros((L, 1, D), jnp.float32),
        "w1":   w(keys[3], (L, D, F)),
        "w2":   w(keys[4], (L, F, D)),
        "lnfg": jnp.ones((1, D), jnp.float32),
        "lnfb": jnp.zeros((1, D), jnp.float32),
    }


def llm_model_forward(params, input_ids=None, input_embed=None):
    """Mirrors LLMModel.forward: returns hidden_states[-1][:, 0, :] as [B, D]."""
    weights = (params["ln1g"], params["ln1b"], params["wqkv"], params["wo"],
               params["ln2g"], params["ln2b"], params["w1"], params["w2"],
               params["lnfg"], params["lnfb"])
    if input_ids is not None:
        ids = input_ids.astype(jnp.int32)
        # attention_mask = input_ids.ne(pad_token_id)
        bias = _build_attn_bias(ids != PAD_ID)
        ids_col = ids.reshape(N, 1)
        return _call_encoder(encode_ids_kernel,
                             (ids_col, bias, params["emb"]) + weights)
    else:
        # inputs_embeds path: HF default mask = all ones.
        x0 = input_embed.astype(jnp.float32).reshape(N, D)
        bias = _build_attn_bias(jnp.ones((B, S), dtype=bool))
        return _call_encoder(encode_embeds_kernel, (x0, bias) + weights)


if __name__ == "__main__":
    key = jax.random.PRNGKey(0)
    pkey, dkey = jax.random.split(key)
    params = init_params(pkey)

    # Deterministic input_ids with trailing pad tokens to exercise masking.
    input_ids = jax.random.randint(dkey, (B, S), 1, V, dtype=jnp.int32)
    input_ids = input_ids.at[1, -2:].set(PAD_ID)

    out = llm_model_forward(params, input_ids=input_ids)
    out = jax.block_until_ready(out)
    assert out.shape == (B, D) and out.dtype == jnp.float32
    assert bool(jnp.all(jnp.isfinite(out)))

    # Also exercise the inputs_embeds path once.
    emb_in = 0.02 * jax.random.normal(jax.random.PRNGKey(1), (B, S, D), jnp.float32)
    out2 = jax.block_until_ready(llm_model_forward(params, input_embed=emb_in))
    assert out2.shape == (B, D)

    print("KERNEL_OK")
</pallas_src>

<mosaic_0001>
module attributes {stable_mosaic.version = 11 : i64} {
  func.func @encode_ids_kernel(%arg0: memref<16x1xi32, #tpu.memory_space<vmem>>, %arg1: memref<16x16xf32, #tpu.memory_space<vmem>>, %arg2: memref<100x32xbf16, #tpu.memory_space<vmem>>, %arg3: memref<2x1x32xf32, #tpu.memory_space<vmem>>, %arg4: memref<2x1x32xf32, #tpu.memory_space<vmem>>, %arg5: memref<2x32x96xbf16, #tpu.memory_space<vmem>>, %arg6: memref<2x2x16x32xbf16, #tpu.memory_space<vmem>>, %arg7: memref<2x1x32xf32, #tpu.memory_space<vmem>>, %arg8: memref<2x1x32xf32, #tpu.memory_space<vmem>>, %arg9: memref<2x32x64xbf16, #tpu.memory_space<vmem>>, %arg10: memref<2x64x32xbf16, #tpu.memory_space<vmem>>, %arg11: memref<1x32xf32, #tpu.memory_space<vmem>>, %arg12: memref<1x32xf32, #tpu.memory_space<vmem>>, %arg13: memref<2x32xf32, #tpu.memory_space<vmem>>) attributes {dimension_semantics = [], scalar_prefetch = 0 : i64, scratch_operands = 0 : i64, tpu.core_type = #tpu.core_type<tc>} {
    %c0 = arith.constant 0 : index
    %c0_0 = arith.constant 0 : index
    %0 = vector.load %arg0[%c0, %c0_0] : memref<16x1xi32, #tpu.memory_space<vmem>>, vector<16x1xi32>
    %1 = tpu.iota {dimensions = array<i32: 1>} : vector<16x100xi32>
    %2 = vector.broadcast %0 : vector<16x1xi32> to vector<16x100xi32>
    %3 = arith.cmpi eq, %2, %1 : vector<16x100xi32>
    %4 = arith.extui %3 : vector<16x100xi1> to vector<16x100xi32>
    %5 = arith.sitofp %4 : vector<16x100xi32> to vector<16x100xf32>
    %6 = arith.truncf %5 : vector<16x100xf32> to vector<16x100xbf16>
    %c0_1 = arith.constant 0 : index
    %c0_2 = arith.constant 0 : index
    %7 = vector.load %arg2[%c0_1, %c0_2] : memref<100x32xbf16, #tpu.memory_space<vmem>>, vector<100x32xbf16>
    %cst = arith.constant dense<0.000000e+00> : vector<16x32xf32>
    %8 = tpu.matmul %6, %7, %cst {dimension_numbers = #tpu.dot_dimension_numbers<[1], [0], [0], [1], [0, 0, 1, 1], [], []>} : vector<16x100xbf16>, vector<100x32xbf16>, vector<16x32xf32> -> vector<16x32xf32>
    %c0_3 = arith.constant 0 : index
    %c0_4 = arith.constant 0 : index
    %9 = vector.load %arg1[%c0_3, %c0_4] : memref<16x16xf32, #tpu.memory_space<vmem>>, vector<16x16xf32>
    %c0_5 = arith.constant 0 : index
    %c0_6 = arith.constant 0 : index
    %c0_7 = arith.constant 0 : index
    %10 = vector.load %arg3[%c0_5, %c0_6, %c0_7] : memref<2x1x32xf32, #tpu.memory_space<vmem>>, vector<1x1x32xf32>
    %11 = vector.shape_cast %10 : vector<1x1x32xf32> to vector<1x32xf32>
    %c0_8 = arith.constant 0 : index
    %c0_9 = arith.constant 0 : index
    %c0_10 = arith.constant 0 : index
    %12 = vector.load %arg4[%c0_8, %c0_9, %c0_10] : memref<2x1x32xf32, #tpu.memory_space<vmem>>, vector<1x1x32xf32>
    %13 = vector.shape_cast %12 : vector<1x1x32xf32> to vector<1x32xf32>
    %cst_11 = arith.constant dense<0.000000e+00> : vector<16xf32>
    %14 = vector.multi_reduction <add>, %8, %cst_11 [1] : vector<16x32xf32> to vector<16xf32>
    %15 = vector.shape_cast %14 : vector<16xf32> to vector<16x1xf32>
    %cst_12 = arith.constant 3.200000e+01 : f32
    %16 = vector.broadcast %cst_12 : f32 to vector<16x1xf32>
    %17 = arith.divf %15, %16 : vector<16x1xf32>
    %18 = vector.broadcast %17 : vector<16x1xf32> to vector<16x32xf32>
    %19 = arith.subf %8, %18 : vector<16x32xf32>
    %20 = arith.mulf %19, %19 : vector<16x32xf32>
    %cst_13 = arith.constant dense<0.000000e+00> : vector<16xf32>
    %21 = vector.multi_reduction <add>, %20, %cst_13 [1] : vector<16x32xf32> to vector<16xf32>
    %22 = vector.shape_cast %21 : vector<16xf32> to vector<16x1xf32>
    %cst_14 = arith.constant 3.200000e+01 : f32
    %23 = vector.broadcast %cst_14 : f32 to vector<16x1xf32>
    %24 = arith.divf %22, %23 : vector<16x1xf32>
    %25 = vector.broadcast %17 : vector<16x1xf32> to vector<16x32xf32>
    %26 = arith.subf %8, %25 : vector<16x32xf32>
    %cst_15 = arith.constant 9.99999974E-6 : f32
    %27 = vector.broadcast %cst_15 : f32 to vector<16x1xf32>
    %28 = arith.addf %24, %27 : vector<16x1xf32>
    %29 = math.rsqrt %28 : vector<16x1xf32>
    %30 = vector.broadcast %29 : vector<16x1xf32> to vector<16x32xf32>
    %31 = arith.mulf %26, %30 : vector<16x32xf32>
    %32 = vector.broadcast %11 : vector<1x32xf32> to vector<16x32xf32>
    %33 = arith.mulf %31, %32 : vector<16x32xf32>
    %34 = vector.broadcast %13 : vector<1x32xf32> to vector<16x32xf32>
    %35 = arith.addf %33, %34 : vector<16x32xf32>
    %36 = arith.truncf %35 : vector<16x32xf32> to vector<16x32xbf16>
    %c0_16 = arith.constant 0 : index
    %c0_17 = arith.constant 0 : index
    %c0_18 = arith.constant 0 : index
    %37 = vector.load %arg5[%c0_16, %c0_17, %c0_18] : memref<2x32x96xbf16, #tpu.memory_space<vmem>>, vector<1x32x96xbf16>
    %38 = vector.shape_cast %37 : vector<1x32x96xbf16> to vector<32x96xbf16>
    %cst_19 = arith.constant dense<0.000000e+00> : vector<16x96xf32>
    %39 = tpu.matmul %36, %38, %cst_19 {dimension_numbers = #tpu.dot_dimension_numbers<[1], [0], [0], [1], [0, 0, 1, 1], [], []>} : vector<16x32xbf16>, vector<32x96xbf16>, vector<16x96xf32> -> vector<16x96xf32>
    %40 = vector.extract_strided_slice %39 {offsets = [0, 0], sizes = [16, 32], strides = [1, 1]} : vector<16x96xf32> to vector<16x32xf32>
    %cst_20 = arith.constant 2.500000e-01 : f32
    %41 = vector.broadcast %cst_20 : f32 to vector<16x32xf32>
    %42 = arith.mulf %40, %41 : vector<16x32xf32>
    %43 = vector.extract_strided_slice %39 {offsets = [0, 32], sizes = [16, 32], strides = [1, 1]} : vector<16x96xf32> to vector<16x32xf32>
    %44 = vector.extract_strided_slice %39 {offsets = [0, 64], sizes = [16, 32], strides = [1, 1]} : vector<16x96xf32> to vector<16x32xf32>
    %45 = arith.truncf %44 : vector<16x32xf32> to vector<16x32xbf16>
    %cst_21 = arith.constant 0.000000e+00 : f32
    %46 = vector.broadcast %cst_21 : f32 to vector<16x32xf32>
    %47 = vector.extract_strided_slice %42 {offsets = [0, 0], sizes = [16, 16], strides = [1, 1]} : vector<16x32xf32> to vector<16x16xf32>
    %48 = arith.truncf %47 : vector<16x16xf32> to vector<16x16xbf16>
    %49 = vector.extract_strided_slice %43 {offsets = [0, 0], sizes = [16, 16], strides = [1, 1]} : vector<16x32xf32> to vector<16x16xf32>
    %50 = arith.truncf %49 : vector<16x16xf32> to vector<16x16xbf16>
    %cst_22 = arith.constant dense<0.000000e+00> : vector<16x16xf32>
    %51 = tpu.matmul %48, %50, %cst_22 {dimension_numbers = #tpu.dot_dimension_numbers<[1], [1], [0], [0], [0, 0, 1, 0], [], []>} : vector<16x16xbf16>, vector<16x16xbf16>, vector<16x16xf32> -> vector<16x16xf32>
    %52 = arith.addf %51, %9 : vector<16x16xf32>
    %cst_23 = arith.constant dense<0xFF800000> : vector<16xf32>
    %53 = vector.multi_reduction <maximumf>, %52, %cst_23 [1] : vector<16x16xf32> to vector<16xf32>
    %54 = vector.shape_cast %53 : vector<16xf32> to vector<16x1xf32>
    %55 = vector.broadcast %54 : vector<16x1xf32> to vector<16x16xf32>
    %56 = arith.subf %52, %55 : vector<16x16xf32>
    %57 = math.exp %56 : vector<16x16xf32>
    %cst_24 = arith.constant dense<0.000000e+00> : vector<16xf32>
    %58 = vector.multi_reduction <add>, %57, %cst_24 [1] : vector<16x16xf32> to vector<16xf32>
    %59 = vector.shape_cast %58 : vector<16xf32> to vector<16x1xf32>
    %60 = tpu.reciprocal %59 {approx = true} : vector<16x1xf32> -> vector<16x1xf32>
    %61 = vector.broadcast %60 : vector<16x1xf32> to vector<16x16xf32>
    %62 = arith.mulf %57, %61 : vector<16x16xf32>
    %63 = arith.truncf %62 : vector<16x16xf32> to vector<16x16xbf16>
    %64 = vector.extract_strided_slice %45 {offsets = [0, 0], sizes = [16, 16], strides = [1, 1]} : vector<16x32xbf16> to vector<16x16xbf16>
    %cst_25 = arith.constant dense<0.000000e+00> : vector<16x16xf32>
    %65 = tpu.matmul %63, %64, %cst_25 {dimension_numbers = #tpu.dot_dimension_numbers<[1], [0], [0], [1], [0, 0, 1, 1], [], []>} : vector<16x16xbf16>, vector<16x16xbf16>, vector<16x16xf32> -> vector<16x16xf32>
    %66 = arith.truncf %65 : vector<16x16xf32> to vector<16x16xbf16>
    %c0_26 = arith.constant 0 : index
    %c0_27 = arith.constant 0 : index
    %c0_28 = arith.constant 0 : index
    %c0_29 = arith.constant 0 : index
    %67 = vector.load %arg6[%c0_26, %c0_27, %c0_28, %c0_29] : memref<2x2x16x32xbf16, #tpu.memory_space<vmem>>, vector<1x1x16x32xbf16>
    %68 = vector.shape_cast %67 : vector<1x1x16x32xbf16> to vector<16x32xbf16>
    %cst_30 = arith.constant dense<0.000000e+00> : vector<16x32xf32>
    %69 = tpu.matmul %66, %68, %cst_30 {dimension_numbers = #tpu.dot_dimension_numbers<[1], [0], [0], [1], [0, 0, 1, 1], [], []>} : vector<16x16xbf16>, vector<16x32xbf16>, vector<16x32xf32> -> vector<16x32xf32>
    %70 = arith.addf %46, %69 : vector<16x32xf32>
    %71 = vector.extract_strided_slice %42 {offsets = [0, 16], sizes = [16, 16], strides = [1, 1]} : vector<16x32xf32> to vector<16x16xf32>
    %72 = arith.truncf %71 : vector<16x16xf32> to vector<16x16xbf16>
    %73 = vector.extract_strided_slice %43 {offsets = [0, 16], sizes = [16, 16], strides = [1, 1]} : vector<16x32xf32> to vector<16x16xf32>
    %74 = arith.truncf %73 : vector<16x16xf32> to vector<16x16xbf16>
    %cst_31 = arith.constant dense<0.000000e+00> : vector<16x16xf32>
    %75 = tpu.matmul %72, %74, %cst_31 {dimension_numbers = #tpu.dot_dimension_numbers<[1], [1], [0], [0], [0, 0, 1, 0], [], []>} : vector<16x16xbf16>, vector<16x16xbf16>, vector<16x16xf32> -> vector<16x16xf32>
    %76 = arith.addf %75, %9 : vector<16x16xf32>
    %cst_32 = arith.constant dense<0xFF800000> : vector<16xf32>
    %77 = vector.multi_reduction <maximumf>, %76, %cst_32 [1] : vector<16x16xf32> to vector<16xf32>
    %78 = vector.shape_cast %77 : vector<16xf32> to vector<16x1xf32>
    %79 = vector.broadcast %78 : vector<16x1xf32> to vector<16x16xf32>
    %80 = arith.subf %76, %79 : vector<16x16xf32>
    %81 = math.exp %80 : vector<16x16xf32>
    %cst_33 = arith.constant dense<0.000000e+00> : vector<16xf32>
    %82 = vector.multi_reduction <add>, %81, %cst_33 [1] : vector<16x16xf32> to vector<16xf32>
    %83 = vector.shape_cast %82 : vector<16xf32> to vector<16x1xf32>
    %84 = tpu.reciprocal %83 {approx = true} : vector<16x1xf32> -> vector<16x1xf32>
    %85 = vector.broadcast %84 : vector<16x1xf32> to vector<16x16xf32>
    %86 = arith.mulf %81, %85 : vector<16x16xf32>
    %87 = arith.truncf %86 : vector<16x16xf32> to vector<16x16xbf16>
    %88 = vector.extract_strided_slice %45 {offsets = [0, 16], sizes = [16, 16], strides = [1, 1]} : vector<16x32xbf16> to vector<16x16xbf16>
    %cst_34 = arith.constant dense<0.000000e+00> : vector<16x16xf32>
    %89 = tpu.matmul %87, %88, %cst_34 {dimension_numbers = #tpu.dot_dimension_numbers<[1], [0], [0], [1], [0, 0, 1, 1], [], []>} : vector<16x16xbf16>, vector<16x16xbf16>, vector<16x16xf32> -> vector<16x16xf32>
    %90 = arith.truncf %89 : vector<16x16xf32> to vector<16x16xbf16>
    %c0_35 = arith.constant 0 : index
    %c1 = arith.constant 1 : index
    %c0_36 = arith.constant 0 : index
    %c0_37 = arith.constant 0 : index
    %91 = vector.load %arg6[%c0_35, %c1, %c0_36, %c0_37] : memref<2x2x16x32xbf16, #tpu.memory_space<vmem>>, vector<1x1x16x32xbf16>
    %92 = vector.shape_cast %91 : vector<1x1x16x32xbf16> to vector<16x32xbf16>
    %cst_38 = arith.constant dense<0.000000e+00> : vector<16x32xf32>
    %93 = tpu.matmul %90, %92, %cst_38 {dimension_numbers = #tpu.dot_dimension_numbers<[1], [0], [0], [1], [0, 0, 1, 1], [], []>} : vector<16x16xbf16>, vector<16x32xbf16>, vector<16x32xf32> -> vector<16x32xf32>
    %94 = arith.addf %70, %93 : vector<16x32xf32>
    %95 = arith.addf %8, %94 : vector<16x32xf32>
    %c0_39 = arith.constant 0 : index
    %c0_40 = arith.constant 0 : index
    %c0_41 = arith.constant 0 : index
    %96 = vector.load %arg7[%c0_39, %c0_40, %c0_41] : memref<2x1x32xf32, #tpu.memory_space<vmem>>, vector<1x1x32xf32>
    %97 = vector.shape_cast %96 : vector<1x1x32xf32> to vector<1x32xf32>
    %c0_42 = arith.constant 0 : index
    %c0_43 = arith.constant 0 : index
    %c0_44 = arith.constant 0 : index
    %98 = vector.load %arg8[%c0_42, %c0_43, %c0_44] : memref<2x1x32xf32, #tpu.memory_space<vmem>>, vector<1x1x32xf32>
    %99 = vector.shape_cast %98 : vector<1x1x32xf32> to vector<1x32xf32>
    %cst_45 = arith.constant dense<0.000000e+00> : vector<16xf32>
    %100 = vector.multi_reduction <add>, %95, %cst_45 [1] : vector<16x32xf32> to vector<16xf32>
    %101 = vector.shape_cast %100 : vector<16xf32> to vector<16x1xf32>
    %cst_46 = arith.constant 3.200000e+01 : f32
    %102 = vector.broadcast %cst_46 : f32 to vector<16x1xf32>
    %103 = arith.divf %101, %102 : vector<16x1xf32>
    %104 = vector.broadcast %103 : vector<16x1xf32> to vector<16x32xf32>
    %105 = arith.subf %95, %104 : vector<16x32xf32>
    %106 = arith.mulf %105, %105 : vector<16x32xf32>
    %cst_47 = arith.constant dense<0.000000e+00> : vector<16xf32>
    %107 = vector.multi_reduction <add>, %106, %cst_47 [1] : vector<16x32xf32> to vector<16xf32>
    %108 = vector.shape_cast %107 : vector<16xf32> to vector<16x1xf32>
    %cst_48 = arith.constant 3.200000e+01 : f32
    %109 = vector.broadcast %cst_48 : f32 to vector<16x1xf32>
    %110 = arith.divf %108, %109 : vector<16x1xf32>
    %111 = vector.broadcast %103 : vector<16x1xf32> to vector<16x32xf32>
    %112 = arith.subf %95, %111 : vector<16x32xf32>
    %cst_49 = arith.constant 9.99999974E-6 : f32
    %113 = vector.broadcast %cst_49 : f32 to vector<16x1xf32>
    %114 = arith.addf %110, %113 : vector<16x1xf32>
    %115 = math.rsqrt %114 : vector<16x1xf32>
    %116 = vector.broadcast %115 : vector<16x1xf32> to vector<16x32xf32>
    %117 = arith.mulf %112, %116 : vector<16x32xf32>
    %118 = vector.broadcast %97 : vector<1x32xf32> to vector<16x32xf32>
    %119 = arith.mulf %117, %118 : vector<16x32xf32>
    %120 = vector.broadcast %99 : vector<1x32xf32> to vector<16x32xf32>
    %121 = arith.addf %119, %120 : vector<16x32xf32>
    %122 = arith.truncf %121 : vector<16x32xf32> to vector<16x32xbf16>
    %c0_50 = arith.constant 0 : index
    %c0_51 = arith.constant 0 : index
    %c0_52 = arith.constant 0 : index
    %123 = vector.load %arg9[%c0_50, %c0_51, %c0_52] : memref<2x32x64xbf16, #tpu.memory_space<vmem>>, vector<1x32x64xbf16>
    %124 = vector.shape_cast %123 : vector<1x32x64xbf16> to vector<32x64xbf16>
    %cst_53 = arith.constant dense<0.000000e+00> : vector<16x64xf32>
    %125 = tpu.matmul %122, %124, %cst_53 {dimension_numbers = #tpu.dot_dimension_numbers<[1], [0], [0], [1], [0, 0, 1, 1], [], []>} : vector<16x32xbf16>, vector<32x64xbf16>, vector<16x64xf32> -> vector<16x64xf32>
    %126 = arith.mulf %125, %125 : vector<16x64xf32>
    %127 = arith.mulf %125, %126 : vector<16x64xf32>
    %cst_54 = arith.constant 4.471500e-02 : f32
    %128 = vector.broadcast %cst_54 : f32 to vector<16x64xf32>
    %129 = arith.mulf %128, %127 : vector<16x64xf32>
    %130 = arith.addf %125, %129 : vector<16x64xf32>
    %cst_55 = arith.constant 0.797884583 : f32
    %131 = vector.broadcast %cst_55 : f32 to vector<16x64xf32>
    %132 = arith.mulf %131, %130 : vector<16x64xf32>
    %133 = math.tanh %132 : vector<16x64xf32>
    %cst_56 = arith.constant 1.000000e+00 : f32
    %134 = vector.broadcast %cst_56 : f32 to vector<16x64xf32>
    %135 = arith.addf %134, %133 : vector<16x64xf32>
    %cst_57 = arith.constant 5.000000e-01 : f32
    %136 = vector.broadcast %cst_57 : f32 to vector<16x64xf32>
    %137 = arith.mulf %136, %135 : vector<16x64xf32>
    %138 = arith.mulf %125, %137 : vector<16x64xf32>
    %139 = arith.truncf %138 : vector<16x64xf32> to vector<16x64xbf16>
    %c0_58 = arith.constant 0 : index
    %c0_59 = arith.constant 0 : index
    %c0_60 = arith.constant 0 : index
    %140 = vector.load %arg10[%c0_58, %c0_59, %c0_60] : memref<2x64x32xbf16, #tpu.memory_space<vmem>>, vector<1x64x32xbf16>
    %141 = vector.shape_cast %140 : vector<1x64x32xbf16> to vector<64x32xbf16>
    %cst_61 = arith.constant dense<0.000000e+00> : vector<16x32xf32>
    %142 = tpu.matmul %139, %141, %cst_61 {dimension_numbers = #tpu.dot_dimension_numbers<[1], [0], [0], [1], [0, 0, 1, 1], [], []>} : vector<16x64xbf16>, vector<64x32xbf16>, vector<16x32xf32> -> vector<16x32xf32>
    %143 = arith.addf %95, %142 : vector<16x32xf32>
    %c1_62 = arith.constant 1 : index
    %c0_63 = arith.constant 0 : index
    %c0_64 = arith.constant 0 : index
    %144 = vector.load %arg3[%c1_62, %c0_63, %c0_64] : memref<2x1x32xf32, #tpu.memory_space<vmem>>, vector<1x1x32xf32>
    %145 = vector.shape_cast %144 : vector<1x1x32xf32> to vector<1x32xf32>
    %c1_65 = arith.constant 1 : index
    %c0_66 = arith.constant 0 : index
    %c0_67 = arith.constant 0 : index
    %146 = vector.load %arg4[%c1_65, %c0_66, %c0_67] : memref<2x1x32xf32, #tpu.memory_space<vmem>>, vector<1x1x32xf32>
    %147 = vector.shape_cast %146 : vector<1x1x32xf32> to vector<1x32xf32>
    %cst_68 = arith.constant dense<0.000000e+00> : vector<16xf32>
    %148 = vector.multi_reduction <add>, %143, %cst_68 [1] : vector<16x32xf32> to vector<16xf32>
    %149 = vector.shape_cast %148 : vector<16xf32> to vector<16x1xf32>
    %cst_69 = arith.constant 3.200000e+01 : f32
    %150 = vector.broadcast %cst_69 : f32 to vector<16x1xf32>
    %151 = arith.divf %149, %150 : vector<16x1xf32>
    %152 = vector.broadcast %151 : vector<16x1xf32> to vector<16x32xf32>
    %153 = arith.subf %143, %152 : vector<16x32xf32>
    %154 = arith.mulf %153, %153 : vector<16x32xf32>
    %cst_70 = arith.constant dense<0.000000e+00> : vector<16xf32>
    %155 = vector.multi_reduction <add>, %154, %cst_70 [1] : vector<16x32xf32> to vector<16xf32>
    %156 = vector.shape_cast %155 : vector<16xf32> to vector<16x1xf32>
    %cst_71 = arith.constant 3.200000e+01 : f32
    %157 = vector.broadcast %cst_71 : f32 to vector<16x1xf32>
    %158 = arith.divf %156, %157 : vector<16x1xf32>
    %159 = vector.broadcast %151 : vector<16x1xf32> to vector<16x32xf32>
    %160 = arith.subf %143, %159 : vector<16x32xf32>
    %cst_72 = arith.constant 9.99999974E-6 : f32
    %161 = vector.broadcast %cst_72 : f32 to vector<16x1xf32>
    %162 = arith.addf %158, %161 : vector<16x1xf32>
    %163 = math.rsqrt %162 : vector<16x1xf32>
    %164 = vector.broadcast %163 : vector<16x1xf32> to vector<16x32xf32>
    %165 = arith.mulf %160, %164 : vector<16x32xf32>
    %166 = vector.broadcast %145 : vector<1x32xf32> to vector<16x32xf32>
    %167 = arith.mulf %165, %166 : vector<16x32xf32>
    %168 = vector.broadcast %147 : vector<1x32xf32> to vector<16x32xf32>
    %169 = arith.addf %167, %168 : vector<16x32xf32>
    %170 = arith.truncf %169 : vector<16x32xf32> to vector<16x32xbf16>
    %c1_73 = arith.constant 1 : index
    %c0_74 = arith.constant 0 : index
    %c0_75 = arith.constant 0 : index
    %171 = vector.load %arg5[%c1_73, %c0_74, %c0_75] : memref<2x32x96xbf16, #tpu.memory_space<vmem>>, vector<1x32x96xbf16>
    %172 = vector.shape_cast %171 : vector<1x32x96xbf16> to vector<32x96xbf16>
    %cst_76 = arith.constant dense<0.000000e+00> : vector<16x96xf32>
    %173 = tpu.matmul %170, %172, %cst_76 {dimension_numbers = #tpu.dot_dimension_numbers<[1], [0], [0], [1], [0, 0, 1, 1], [], []>} : vector<16x32xbf16>, vector<32x96xbf16>, vector<16x96xf32> -> vector<16x96xf32>
    %174 = vector.extract_strided_slice %173 {offsets = [0, 0], sizes = [16, 32], strides = [1, 1]} : vector<16x96xf32> to vector<16x32xf32>
    %cst_77 = arith.constant 2.500000e-01 : f32
    %175 = vector.broadcast %cst_77 : f32 to vector<16x32xf32>
    %176 = arith.mulf %174, %175 : vector<16x32xf32>
    %177 = vector.extract_strided_slice %173 {offsets = [0, 32], sizes = [16, 32], strides = [1, 1]} : vector<16x96xf32> to vector<16x32xf32>
    %178 = vector.extract_strided_slice %173 {offsets = [0, 64], sizes = [16, 32], strides = [1, 1]} : vector<16x96xf32> to vector<16x32xf32>
    %179 = arith.truncf %178 : vector<16x32xf32> to vector<16x32xbf16>
    %cst_78 = arith.constant 0.000000e+00 : f32
    %180 = vector.broadcast %cst_78 : f32 to vector<16x32xf32>
    %181 = vector.extract_strided_slice %176 {offsets = [0, 0], sizes = [16, 16], strides = [1, 1]} : vector<16x32xf32> to vector<16x16xf32>
    %182 = arith.truncf %181 : vector<16x16xf32> to vector<16x16xbf16>
    %183 = vector.extract_strided_slice %177 {offsets = [0, 0], sizes = [16, 16], strides = [1, 1]} : vector<16x32xf32> to vector<16x16xf32>
    %184 = arith.truncf %183 : vector<16x16xf32> to vector<16x16xbf16>
    %cst_79 = arith.constant dense<0.000000e+00> : vector<16x16xf32>
    %185 = tpu.matmul %182, %184, %cst_79 {dimension_numbers = #tpu.dot_dimension_numbers<[1], [1], [0], [0], [0, 0, 1, 0], [], []>} : vector<16x16xbf16>, vector<16x16xbf16>, vector<16x16xf32> -> vector<16x16xf32>
    %186 = arith.addf %185, %9 : vector<16x16xf32>
    %cst_80 = arith.constant dense<0xFF800000> : vector<16xf32>
    %187 = vector.multi_reduction <maximumf>, %186, %cst_80 [1] : vector<16x16xf32> to vector<16xf32>
    %188 = vector.shape_cast %187 : vector<16xf32> to vector<16x1xf32>
    %189 = vector.broadcast %188 : vector<16x1xf32> to vector<16x16xf32>
    %190 = arith.subf %186, %189 : vector<16x16xf32>
    %191 = math.exp %190 : vector<16x16xf32>
    %cst_81 = arith.constant dense<0.000000e+00> : vector<16xf32>
    %192 = vector.multi_reduction <add>, %191, %cst_81 [1] : vector<16x16xf32> to vector<16xf32>
    %193 = vector.shape_cast %192 : vector<16xf32> to vector<16x1xf32>
    %194 = tpu.reciprocal %193 {approx = true} : vector<16x1xf32> -> vector<16x1xf32>
    %195 = vector.broadcast %194 : vector<16x1xf32> to vector<16x16xf32>
    %196 = arith.mulf %191, %195 : vector<16x16xf32>
    %197 = arith.truncf %196 : vector<16x16xf32> to vector<16x16xbf16>
    %198 = vector.extract_strided_slice %179 {offsets = [0, 0], sizes = [16, 16], strides = [1, 1]} : vector<16x32xbf16> to vector<16x16xbf16>
    %cst_82 = arith.constant dense<0.000000e+00> : vector<16x16xf32>
    %199 = tpu.matmul %197, %198, %cst_82 {dimension_numbers = #tpu.dot_dimension_numbers<[1], [0], [0], [1], [0, 0, 1, 1], [], []>} : vector<16x16xbf16>, vector<16x16xbf16>, vector<16x16xf32> -> vector<16x16xf32>
    %200 = arith.truncf %199 : vector<16x16xf32> to vector<16x16xbf16>
    %c1_83 = arith.constant 1 : index
    %c0_84 = arith.constant 0 : index
    %c0_85 = arith.constant 0 : index
    %c0_86 = arith.constant 0 : index
    %201 = vector.load %arg6[%c1_83, %c0_84, %c0_85, %c0_86] : memref<2x2x16x32xbf16, #tpu.memory_space<vmem>>, vector<1x1x16x32xbf16>
    %202 = vector.shape_cast %201 : vector<1x1x16x32xbf16> to vector<16x32xbf16>
    %cst_87 = arith.constant dense<0.000000e+00> : vector<16x32xf32>
    %203 = tpu.matmul %200, %202, %cst_87 {dimension_numbers = #tpu.dot_dimension_numbers<[1], [0], [0], [1], [0, 0, 1, 1], [], []>} : vector<16x16xbf16>, vector<16x32xbf16>, vector<16x32xf32> -> vector<16x32xf32>
    %204 = arith.addf %180, %203 : vector<16x32xf32>
    %205 = vector.extract_strided_slice %176 {offsets = [0, 16], sizes = [16, 16], strides = [1, 1]} : vector<16x32xf32> to vector<16x16xf32>
    %206 = arith.truncf %205 : vector<16x16xf32> to vector<16x16xbf16>
    %207 = vector.extract_strided_slice %177 {offsets = [0, 16], sizes = [16, 16], strides = [1, 1]} : vector<16x32xf32> to vector<16x16xf32>
    %208 = arith.truncf %207 : vector<16x16xf32> to vector<16x16xbf16>
    %cst_88 = arith.constant dense<0.000000e+00> : vector<16x16xf32>
    %209 = tpu.matmul %206, %208, %cst_88 {dimension_numbers = #tpu.dot_dimension_numbers<[1], [1], [0], [0], [0, 0, 1, 0], [], []>} : vector<16x16xbf16>, vector<16x16xbf16>, vector<16x16xf32> -> vector<16x16xf32>
    %210 = arith.addf %209, %9 : vector<16x16xf32>
    %cst_89 = arith.constant dense<0xFF800000> : vector<16xf32>
    %211 = vector.multi_reduction <maximumf>, %210, %cst_89 [1] : vector<16x16xf32> to vector<16xf32>
    %212 = vector.shape_cast %211 : vector<16xf32> to vector<16x1xf32>
    %213 = vector.broadcast %212 : vector<16x1xf32> to vector<16x16xf32>
    %214 = arith.subf %210, %213 : vector<16x16xf32>
    %215 = math.exp %214 : vector<16x16xf32>
    %cst_90 = arith.constant dense<0.000000e+00> : vector<16xf32>
    %216 = vector.multi_reduction <add>, %215, %cst_90 [1] : vector<16x16xf32> to vector<16xf32>
    %217 = vector.shape_cast %216 : vector<16xf32> to vector<16x1xf32>
    %218 = tpu.reciprocal %217 {approx = true} : vector<16x1xf32> -> vector<16x1xf32>
    %219 = vector.broadcast %218 : vector<16x1xf32> to vector<16x16xf32>
    %220 = arith.mulf %215, %219 : vector<16x16xf32>
    %221 = arith.truncf %220 : vector<16x16xf32> to vector<16x16xbf16>
    %222 = vector.extract_strided_slice %179 {offsets = [0, 16], sizes = [16, 16], strides = [1, 1]} : vector<16x32xbf16> to vector<16x16xbf16>
    %cst_91 = arith.constant dense<0.000000e+00> : vector<16x16xf32>
    %223 = tpu.matmul %221, %222, %cst_91 {dimension_numbers = #tpu.dot_dimension_numbers<[1], [0], [0], [1], [0, 0, 1, 1], [], []>} : vector<16x16xbf16>, vector<16x16xbf16>, vector<16x16xf32> -> vector<16x16xf32>
    %224 = arith.truncf %223 : vector<16x16xf32> to vector<16x16xbf16>
    %c1_92 = arith.constant 1 : index
    %c1_93 = arith.constant 1 : index
    %c0_94 = arith.constant 0 : index
    %c0_95 = arith.constant 0 : index
    %225 = vector.load %arg6[%c1_92, %c1_93, %c0_94, %c0_95] : memref<2x2x16x32xbf16, #tpu.memory_space<vmem>>, vector<1x1x16x32xbf16>
    %226 = vector.shape_cast %225 : vector<1x1x16x32xbf16> to vector<16x32xbf16>
    %cst_96 = arith.constant dense<0.000000e+00> : vector<16x32xf32>
    %227 = tpu.matmul %224, %226, %cst_96 {dimension_numbers = #tpu.dot_dimension_numbers<[1], [0], [0], [1], [0, 0, 1, 1], [], []>} : vector<16x16xbf16>, vector<16x32xbf16>, vector<16x32xf32> -> vector<16x32xf32>
    %228 = arith.addf %204, %227 : vector<16x32xf32>
    %229 = arith.addf %143, %228 : vector<16x32xf32>
    %c1_97 = arith.constant 1 : index
    %c0_98 = arith.constant 0 : index
    %c0_99 = arith.constant 0 : index
    %230 = vector.load %arg7[%c1_97, %c0_98, %c0_99] : memref<2x1x32xf32, #tpu.memory_space<vmem>>, vector<1x1x32xf32>
    %231 = vector.shape_cast %230 : vector<1x1x32xf32> to vector<1x32xf32>
    %c1_100 = arith.constant 1 : index
    %c0_101 = arith.constant 0 : index
    %c0_102 = arith.constant 0 : index
    %232 = vector.load %arg8[%c1_100, %c0_101, %c0_102] : memref<2x1x32xf32, #tpu.memory_space<vmem>>, vector<1x1x32xf32>
    %233 = vector.shape_cast %232 : vector<1x1x32xf32> to vector<1x32xf32>
    %cst_103 = arith.constant dense<0.000000e+00> : vector<16xf32>
    %234 = vector.multi_reduction <add>, %229, %cst_103 [1] : vector<16x32xf32> to vector<16xf32>
    %235 = vector.shape_cast %234 : vector<16xf32> to vector<16x1xf32>
    %cst_104 = arith.constant 3.200000e+01 : f32
    %236 = vector.broadcast %cst_104 : f32 to vector<16x1xf32>
    %237 = arith.divf %235, %236 : vector<16x1xf32>
    %238 = vector.broadcast %237 : vector<16x1xf32> to vector<16x32xf32>
    %239 = arith.subf %229, %238 : vector<16x32xf32>
    %240 = arith.mulf %239, %239 : vector<16x32xf32>
    %cst_105 = arith.constant dense<0.000000e+00> : vector<16xf32>
    %241 = vector.multi_reduction <add>, %240, %cst_105 [1] : vector<16x32xf32> to vector<16xf32>
    %242 = vector.shape_cast %241 : vector<16xf32> to vector<16x1xf32>
    %cst_106 = arith.constant 3.200000e+01 : f32
    %243 = vector.broadcast %cst_106 : f32 to vector<16x1xf32>
    %244 = arith.divf %242, %243 : vector<16x1xf32>
    %245 = vector.broadcast %237 : vector<16x1xf32> to vector<16x32xf32>
    %246 = arith.subf %229, %245 : vector<16x32xf32>
    %cst_107 = arith.constant 9.99999974E-6 : f32
    %247 = vector.broadcast %cst_107 : f32 to vector<16x1xf32>
    %248 = arith.addf %244, %247 : vector<16x1xf32>
    %249 = math.rsqrt %248 : vector<16x1xf32>
    %250 = vector.broadcast %249 : vector<16x1xf32> to vector<16x32xf32>
    %251 = arith.mulf %246, %250 : vector<16x32xf32>
    %252 = vector.broadcast %231 : vector<1x32xf32> to vector<16x32xf32>
    %253 = arith.mulf %251, %252 : vector<16x32xf32>
    %254 = vector.broadcast %233 : vector<1x32xf32> to vector<16x32xf32>
    %255 = arith.addf %253, %254 : vector<16x32xf32>
    %256 = arith.truncf %255 : vector<16x32xf32> to vector<16x32xbf16>
    %c1_108 = arith.constant 1 : index
    %c0_109 = arith.constant 0 : index
    %c0_110 = arith.constant 0 : index
    %257 = vector.load %arg9[%c1_108, %c0_109, %c0_110] : memref<2x32x64xbf16, #tpu.memory_space<vmem>>, vector<1x32x64xbf16>
    %258 = vector.shape_cast %257 : vector<1x32x64xbf16> to vector<32x64xbf16>
    %cst_111 = arith.constant dense<0.000000e+00> : vector<16x64xf32>
    %259 = tpu.matmul %256, %258, %cst_111 {dimension_numbers = #tpu.dot_dimension_numbers<[1], [0], [0], [1], [0, 0, 1, 1], [], []>} : vector<16x32xbf16>, vector<32x64xbf16>, vector<16x64xf32> -> vector<16x64xf32>
    %260 = arith.mulf %259, %259 : vector<16x64xf32>
    %261 = arith.mulf %259, %260 : vector<16x64xf32>
    %cst_112 = arith.constant 4.471500e-02 : f32
    %262 = vector.broadcast %cst_112 : f32 to vector<16x64xf32>
    %263 = arith.mulf %262, %261 : vector<16x64xf32>
    %264 = arith.addf %259, %263 : vector<16x64xf32>
    %cst_113 = arith.constant 0.797884583 : f32
    %265 = vector.broadcast %cst_113 : f32 to vector<16x64xf32>
    %266 = arith.mulf %265, %264 : vector<16x64xf32>
    %267 = math.tanh %266 : vector<16x64xf32>
    %cst_114 = arith.constant 1.000000e+00 : f32
    %268 = vector.broadcast %cst_114 : f32 to vector<16x64xf32>
    %269 = arith.addf %268, %267 : vector<16x64xf32>
    %cst_115 = arith.constant 5.000000e-01 : f32
    %270 = vector.broadcast %cst_115 : f32 to vector<16x64xf32>
    %271 = arith.mulf %270, %269 : vector<16x64xf32>
    %272 = arith.mulf %259, %271 : vector<16x64xf32>
    %273 = arith.truncf %272 : vector<16x64xf32> to vector<16x64xbf16>
    %c1_116 = arith.constant 1 : index
    %c0_117 = arith.constant 0 : index
    %c0_118 = arith.constant 0 : index
    %274 = vector.load %arg10[%c1_116, %c0_117, %c0_118] : memref<2x64x32xbf16, #tpu.memory_space<vmem>>, vector<1x64x32xbf16>
    %275 = vector.shape_cast %274 : vector<1x64x32xbf16> to vector<64x32xbf16>
    %cst_119 = arith.constant dense<0.000000e+00> : vector<16x32xf32>
    %276 = tpu.matmul %273, %275, %cst_119 {dimension_numbers = #tpu.dot_dimension_numbers<[1], [0], [0], [1], [0, 0, 1, 1], [], []>} : vector<16x64xbf16>, vector<64x32xbf16>, vector<16x32xf32> -> vector<16x32xf32>
    %277 = arith.addf %229, %276 : vector<16x32xf32>
    %c0_120 = arith.constant 0 : index
    %c0_121 = arith.constant 0 : index
    %278 = vector.load %arg11[%c0_120, %c0_121] : memref<1x32xf32, #tpu.memory_space<vmem>>, vector<1x32xf32>
    %c0_122 = arith.constant 0 : index
    %c0_123 = arith.constant 0 : index
    %279 = vector.load %arg12[%c0_122, %c0_123] : memref<1x32xf32, #tpu.memory_space<vmem>>, vector<1x32xf32>
    %cst_124 = arith.constant dense<0.000000e+00> : vector<16xf32>
    %280 = vector.multi_reduction <add>, %277, %cst_124 [1] : vector<16x32xf32> to vector<16xf32>
    %281 = vector.shape_cast %280 : vector<16xf32> to vector<16x1xf32>
    %cst_125 = arith.constant 3.200000e+01 : f32
    %282 = vector.broadcast %cst_125 : f32 to vector<16x1xf32>
    %283 = arith.divf %281, %282 : vector<16x1xf32>
    %284 = vector.broadcast %283 : vector<16x1xf32> to vector<16x32xf32>
    %285 = arith.subf %277, %284 : vector<16x32xf32>
    %286 = arith.mulf %285, %285 : vector<16x32xf32>
    %cst_126 = arith.constant dense<0.000000e+00> : vector<16xf32>
    %287 = vector.multi_reduction <add>, %286, %cst_126 [1] : vector<16x32xf32> to vector<16xf32>
    %288 = vector.shape_cast %287 : vector<16xf32> to vector<16x1xf32>
    %cst_127 = arith.constant 3.200000e+01 : f32
    %289 = vector.broadcast %cst_127 : f32 to vector<16x1xf32>
    %290 = arith.divf %288, %289 : vector<16x1xf32>
    %291 = vector.broadcast %283 : vector<16x1xf32> to vector<16x32xf32>
    %292 = arith.subf %277, %291 : vector<16x32xf32>
    %cst_128 = arith.constant 9.99999974E-6 : f32
    %293 = vector.broadcast %cst_128 : f32 to vector<16x1xf32>
    %294 = arith.addf %290, %293 : vector<16x1xf32>
    %295 = math.rsqrt %294 : vector<16x1xf32>
    %296 = vector.broadcast %295 : vector<16x1xf32> to vector<16x32xf32>
    %297 = arith.mulf %292, %296 : vector<16x32xf32>
    %298 = vector.broadcast %278 : vector<1x32xf32> to vector<16x32xf32>
    %299 = arith.mulf %297, %298 : vector<16x32xf32>
    %300 = vector.broadcast %279 : vector<1x32xf32> to vector<16x32xf32>
    %301 = arith.addf %299, %300 : vector<16x32xf32>
    %302 = vector.extract_strided_slice %301 {offsets = [0, 0], sizes = [1, 32], strides = [1, 1]} : vector<16x32xf32> to vector<1x32xf32>
    %c0_129 = arith.constant 0 : index
    %c0_130 = arith.constant 0 : index
    %303 = vector.load %arg13[%c0_129, %c0_130] : memref<2x32xf32, #tpu.memory_space<vmem>>, vector<1x32xf32>
    tpu.vector_store %arg13[%c0_129, %c0_130], %302 {strides = array<i32>} : memref<2x32xf32, #tpu.memory_space<vmem>>, vector<1x32xf32>,
    %304 = vector.extract_strided_slice %301 {offsets = [8, 0], sizes = [1, 32], strides = [1, 1]} : vector<16x32xf32> to vector<1x32xf32>
    %c1_131 = arith.constant 1 : index
    %c0_132 = arith.constant 0 : index
    %305 = vector.load %arg13[%c1_131, %c0_132] : memref<2x32xf32, #tpu.memory_space<vmem>>, vector<1x32xf32>
    tpu.vector_store %arg13[%c1_131, %c0_132], %304 {strides = array<i32>} : memref<2x32xf32, #tpu.memory_space<vmem>>, vector<1x32xf32>,
    return
  }
}

</mosaic_0001>

<llo_original>
// kernel: tpu_custom_call.1
$region0: #{tpu_custom_call.1}
  #allocation0 [shape = 'u32[]', space=smem, size = 0x4, offset = 0x4, fixed_abs, tag = 'smem constant byte address 0x4 - core index']
  #allocation1 [shape = 'u32[144,128]{1,0:T(1,128)}', space=vmem, size = 0x12000, scoped, tag = 'internal scratch']
  %s0 = inlined_call_operand.vmem [shape: s32[16,1], index: 0, kind: input, shape index: {}]
  %s1 = inlined_call_operand.vmem [shape: f32[16,16], index: 1, kind: input, shape index: {}]
  %s2 = inlined_call_operand.vmem [shape: bf16[100,32], index: 2, kind: input, shape index: {}]
  %s3 = inlined_call_operand.vmem [shape: f32[2,1,32], index: 3, kind: input, shape index: {}]
  %s4 = inlined_call_operand.vmem [shape: f32[2,1,32], index: 4, kind: input, shape index: {}]
  %s5 = inlined_call_operand.vmem [shape: bf16[2,32,96], index: 5, kind: input, shape index: {}]
  %s6 = inlined_call_operand.vmem [shape: bf16[2,2,16,32], index: 6, kind: input, shape index: {}]
  %s7 = inlined_call_operand.vmem [shape: f32[2,1,32], index: 7, kind: input, shape index: {}]
  %s8 = inlined_call_operand.vmem [shape: f32[2,1,32], index: 8, kind: input, shape index: {}]
  %s9 = inlined_call_operand.vmem [shape: bf16[2,32,64], index: 9, kind: input, shape index: {}]
  %s10 = inlined_call_operand.vmem [shape: bf16[2,64,32], index: 10, kind: input, shape index: {}]
  %s11 = inlined_call_operand.vmem [shape: f32[1,32], index: 11, kind: input, shape index: {}]
  %s12 = inlined_call_operand.vmem [shape: f32[1,32], index: 12, kind: input, shape index: {}]
  %s13 = inlined_call_operand.hbm [shape: f32[2,32], index: 13, kind: output, shape index: {}]
  %s14 = sld [smem:[#allocation0]]
  $region62: #{tpu_custom_call.1} parent=0
    _
  %s16 = ssub.s32 1, %s14
  %s17 = scalar_select 0, %s16, %s14
  $region1: #{tpu_custom_call.1} parent=0
    #allocation2 [shape = 'u8[1024]{0}', space=vmem, size = 0x400, scoped, tag = 'output window, operand 0, single buffered']
    #allocation3 [shape = 's32[1]{0}', space=sflag, size = 0x4, scoped, tag = 'scoped memory for tpu_custom_call.1']
    %18 = vsyncpa [#allocation3], 0
    // Predicated region
    $region2: #{tpu_custom_call.1} parent=1 // pred_check
      _
    $region3: #{tpu_custom_call.1} parent=1 // pred_check_branch
      %20 = sbr.rel (0) target = $region5
    $region4: #{tpu_custom_call.1} parent=1 // pred_region
      _
    $region5: #{tpu_custom_call.1} parent=1 // pred_fallthru
      _
    // Predicated region
    $region6: #{tpu_custom_call.1} parent=1 // pred_check
      _
    $region7: #{tpu_custom_call.1} parent=1 // pred_check_branch
      %22 = sbr.rel (0) target = $region9
    $region8: #{tpu_custom_call.1} parent=1 // pred_region
      _
    $region9: #{tpu_custom_call.1} parent=1 // pred_fallthru
      _
    // Predicated region
    $region10: #{tpu_custom_call.1} parent=1 // pred_check
      _
    $region11: #{tpu_custom_call.1} parent=1 // pred_check_branch
      %24 = sbr.rel (0) target = $region13
    $region12: #{tpu_custom_call.1} parent=1 // pred_region
      _
    $region13: #{tpu_custom_call.1} parent=1 // pred_fallthru
      _
    // Predicated region
    $region14: #{tpu_custom_call.1} parent=1 // pred_check
      _
    $region15: #{tpu_custom_call.1} parent=1 // pred_check_branch
      %26 = sbr.rel (0) target = $region17
    $region16: #{tpu_custom_call.1} parent=1 // pred_region
      _
    $region17: #{tpu_custom_call.1} parent=1 // pred_fallthru
      _
    // Predicated region
    $region18: #{tpu_custom_call.1} parent=1 // pred_check
      _
    $region19: #{tpu_custom_call.1} parent=1 // pred_check_branch
      %28 = sbr.rel (0) target = $region21
    $region20: #{tpu_custom_call.1} parent=1 // pred_region
      _
    $region21: #{tpu_custom_call.1} parent=1 // pred_fallthru
      _
    // Predicated region
    $region22: #{tpu_custom_call.1} parent=1 // pred_check
      _
    $region23: #{tpu_custom_call.1} parent=1 // pred_check_branch
      %30 = sbr.rel (0) target = $region25
    $region24: #{tpu_custom_call.1} parent=1 // pred_region
      _
    $region25: #{tpu_custom_call.1} parent=1 // pred_fallthru
      _
    // Predicated region
    $region26: #{tpu_custom_call.1} parent=1 // pred_check
      _
    $region27: #{tpu_custom_call.1} parent=1 // pred_check_branch
      %32 = sbr.rel (0) target = $region29
    $region28: #{tpu_custom_call.1} parent=1 // pred_region
      _
    $region29: #{tpu_custom_call.1} parent=1 // pred_fallthru
      _
    // Predicated region
    $region30: #{tpu_custom_call.1} parent=1 // pred_check
      _
    $region31: #{tpu_custom_call.1} parent=1 // pred_check_branch
      %34 = sbr.rel (0) target = $region33
    $region32: #{tpu_custom_call.1} parent=1 // pred_region
      _
    $region33: #{tpu_custom_call.1} parent=1 // pred_fallthru
      _
    // Predicated region
    $region34: #{tpu_custom_call.1} parent=1 // pred_check
      _
    $region35: #{tpu_custom_call.1} parent=1 // pred_check_branch
      %36 = sbr.rel (0) target = $region37
    $region36: #{tpu_custom_call.1} parent=1 // pred_region
      _
    $region37: #{tpu_custom_call.1} parent=1 // pred_fallthru
      _
    // Predicated region
    $region38: #{tpu_custom_call.1} parent=1 // pred_check
      _
    $region39: #{tpu_custom_call.1} parent=1 // pred_check_branch
      %38 = sbr.rel (0) target = $region41
    $region40: #{tpu_custom_call.1} parent=1 // pred_region
      _
    $region41: #{tpu_custom_call.1} parent=1 // pred_fallthru
      _
    // Predicated region
    $region42: #{tpu_custom_call.1} parent=1 // pred_check
      _
    $region43: #{tpu_custom_call.1} parent=1 // pred_check_branch
      %40 = sbr.rel (0) target = $region45
    $region44: #{tpu_custom_call.1} parent=1 // pred_region
      _
    $region45: #{tpu_custom_call.1} parent=1 // pred_fallthru
      _
    // Predicated region
    $region46: #{tpu_custom_call.1} parent=1 // pred_check
      _
    $region47: #{tpu_custom_call.1} parent=1 // pred_check_branch
      %42 = sbr.rel (0) target = $region49
    $region48: #{tpu_custom_call.1} parent=1 // pred_region
      _
    $region49: #{tpu_custom_call.1} parent=1 // pred_fallthru
      _
    // Predicated region
    $region50: #{tpu_custom_call.1} parent=1 // pred_check
      _
    $region51: #{tpu_custom_call.1} parent=1 // pred_check_branch
      %44 = sbr.rel (0) target = $region53
    $region52: #{tpu_custom_call.1} parent=1 // pred_region
      _
    $region53: #{tpu_custom_call.1} parent=1 // pred_fallthru
      _
    %v46 = vld [vmem:[%s0] sm:$0xff]
    %v47 = vld [vmem:[%s0 + $0x8] sm:$0xff]
    %v48 = vlaneseq
    %v49 = vand.u32 %v48, 127
    %50 = vset.pattern.permute.xlu0 0
    %51 = vperm.xlu0 %50, %v46
    %v52 = vpop.permute.xlu0 %51
    %53 = vset.pattern.permute.xlu0 0
    %54 = vperm.xlu0 %53, %v47
    %v55 = vpop.permute.xlu0 %54
    %vm56 = vcmp.eq.s32.totalorder %v52, %v49
    %vm57 = vcmp.eq.s32.totalorder %v55, %v49
    %v58 = vsel %vm56, 1, 0
    %v59 = vsel %vm57, 1, 0
    %v60 = vcvt.s32.f32 %v58
    %v61 = vcvt.s32.f32 %v59
    %v62 = vpack.c.bf16 %v61, %v60
    %v63 = vld [vmem:[%s2] sm:$0xf]
    %v64 = vld [vmem:[%s2 + $0x4] sm:$0xf]
    %v65 = vld [vmem:[%s2 + $0x8] sm:$0xf]
    %v66 = vld [vmem:[%s2 + $0xc] sm:$0xf]
    %v67 = vld [vmem:[%s2 + $0x10] sm:$0xf]
    %v68 = vld [vmem:[%s2 + $0x14] sm:$0xf]
    %v69 = vld [vmem:[%s2 + $0x18] sm:$0xf]
    %v70 = vld [vmem:[%s2 + $0x1c] sm:$0xf]
    %v71 = vld [vmem:[%s2 + $0x20] sm:$0xf]
    %v72 = vld [vmem:[%s2 + $0x24] sm:$0xf]
    %v73 = vld [vmem:[%s2 + $0x28] sm:$0xf]
    %v74 = vld [vmem:[%s2 + $0x2c] sm:$0xf]
    %v75 = vld [vmem:[%s2 + $0x30] sm:$0x3]
    %v89 = vunpack.c.l.b16 %v63
    %v90 = vunpack.c.l.b16 %v64
    %v91 = vunpack.c.l.b16 %v65
    %v92 = vunpack.c.l.b16 %v66
    %v93 = vunpack.c.l.b16 %v67
    %v94 = vunpack.c.l.b16 %v68
    %v95 = vunpack.c.l.b16 %v69
    %v96 = vunpack.c.l.b16 %v70
    %v97 = vunpack.c.l.b16 %v71
    %v98 = vunpack.c.l.b16 %v72
    %v99 = vunpack.c.l.b16 %v73
    %v100 = vunpack.c.l.b16 %v74
    %v101 = vunpack.c.l.b16 %v75
    %v102 = vpack.c.b16 %v90, %v89
    %v103 = vpack.c.b16 %v92, %v91
    %v104 = vpack.c.b16 %v94, %v93
    %v105 = vpack.c.b16 %v96, %v95
    %v106 = vpack.c.b16 %v98, %v97
    %v107 = vpack.c.b16 %v100, %v99
    %v108 = vpack.c.b16 %v101, %v101
    %vm115 = vcmask 818176
    %v117 = vsel %vm115, %v62, 0
    %vm119 = vcmask 1041408
    %v121 = vsel %vm119, %v108, 0
    %123 = vmatprep.subr.bf16.mxu0 0
    %124 = vmatpush1.bf16.msra.mxu0 %v102
    %125 = vmatprep.subr.bf16.mxu0 0
    %126 = vmatpush1.bf16.msra.mxu0 %v103
    %127 = vmatprep.subr.bf16.mxu0 0
    %128 = vmatpush1.bf16.msra.mxu0 %v104
    %129 = vmatprep.subr.bf16.mxu0 0
    %130 = vmatpush1.bf16.msra.mxu0 %v105
    %131 = vmatprep.subr.bf16.mxu0 0
    %132 = vmatpush1.bf16.msra.mxu0 %v106
    %133 = vmatprep.subr.bf16.mxu0 0
    %134 = vmatpush1.bf16.msra.mxu0 %v107
    %135 = vmatprep.subr.bf16.mxu0 0
    %136 = vmatpush1.bf16.msra.mxu0 %v121
    %137 = vmatprep.subr.bf16.mxu0 0
    %138 = vmatpush1.bf16.msra.mxu0 0
    %139 = vmatprep.subr.bf16.mxu0 0
    %140 = vmatpush1.bf16.msra.mxu0 0
    %141 = vmatprep.subr.bf16.mxu0 0
    %142 = vmatpush1.bf16.msra.mxu0 0
    %143 = vmatprep.subr.bf16.mxu0 0
    %144 = vmatpush1.bf16.msra.mxu0 0
    %145 = vmatprep.subr.bf16.mxu0 0
    %146 = vmatpush1.bf16.msra.mxu0 0
    %147 = vmatprep.subr.bf16.mxu0 0
    %148 = vmatpush1.bf16.msra.mxu0 0
    %149 = vmatprep.subr.bf16.mxu0 0
    %150 = vmatpush1.bf16.msra.mxu0 0
    %151 = vmatprep.subr.bf16.mxu0 0
    %152 = vmatpush1.bf16.msra.mxu0 0
    %153 = vmatprep.subr.bf16.mxu0 0
    %154 = vmatpush1.bf16.msra.mxu0 0
    %155 = vmatprep.mubr.bf16.mxu0 0
    %156 = vmatmul.mubr.bf16.gmra.mrb[0].mxu0 %v117
    %v157 = vpop.f32.mrb[0].mxu0
    %v158 = vadd.f32 0.0, %v157
    %v159 = vpop.f32.mrb[0].mxu0
    %v160 = vpop.f32.mrb[0].mxu0
    %v161 = vadd.f32 0.0, %v160
    %v162 = vpop.f32.mrb[0].mxu0
    %163 = vdwg.mxu0
    %v164 = vld [vmem:[%s1] sm:$0xff]
    %v165 = vld [vmem:[%s1 + $0x8] sm:$0xff]
    %v166 = vld [vmem:[%s3] sm:$0x1]
    %v167 = vld [vmem:[%s4] sm:$0x1]
    %vm168 = vcmask 261120
    %v169 = vsel %vm168, %v158, 0.0
    %170 = vadd.xlane.f32.xlu0 %v169
    %v171 = vpop.xlane.xlu0 %170
    %v172 = vsel %vm168, %v161, 0.0
    %173 = vadd.xlane.f32.xlu0 %v172
    %v174 = vpop.xlane.xlu0 %173
    %v175 = vrcp.pop 32.0
    %v176 = vmul.f32 %v171, %v175
    %v177 = vmul.f32 %v174, %v175
    %v178 = vsub.f32 %v158, %v176
    %v179 = vsub.f32 %v161, %v177
    %v180 = vmul.f32 %v178, %v178
    %v181 = vmul.f32 %v179, %v179
    %v182 = vsel %vm168, %v180, 0.0
    %183 = vadd.xlane.f32.xlu0 %v182
    %v184 = vpop.xlane.xlu0 %183
    %v185 = vsel %vm168, %v181, 0.0
    %186 = vadd.xlane.f32.xlu0 %v185
    %v187 = vpop.xlane.xlu0 %186
    %v188 = vmul.f32 %v184, %v175
    %v189 = vmul.f32 %v187, %v175
    %v190 = vadd.f32 %v188, 1e-05
    %v191 = vadd.f32 %v189, 1e-05
    %v192 = vrsqrt.pop %v190
    %v193 = vrsqrt.pop %v191
    %v194 = vmul.f32 %v178, %v192
    %v195 = vmul.f32 %v179, %v193
    %v197 = vlaneseq
    %v198 = vshrl.u32 %v197, 7
    %v199 = vsub.s32 0, %v198
    %v200 = vrot.slane %v166, %v199
    %v202 = vmul.f32 %v194, %v200
    %v203 = vmul.f32 %v195, %v200
    %v205 = vlaneseq
    %v206 = vshrl.u32 %v205, 7
    %v207 = vsub.s32 0, %v206
    %v208 = vrot.slane %v167, %v207
    %v210 = vadd.f32 %v202, %v208
    %v211 = vadd.f32 %v203, %v208
    %v212 = vpack.c.bf16 %v211, %v210
    %v213 = vld [vmem:[%s5] sm:$0xf]
    %v214 = vld [vmem:[%s5 + $0x4] sm:$0xf]
    %v215 = vld [vmem:[%s5 + $0x8] sm:$0xf]
    %v216 = vld [vmem:[%s5 + $0xc] sm:$0xf]
    %v221 = vunpack.c.l.b16 %v213
    %v222 = vunpack.c.l.b16 %v214
    %v223 = vunpack.c.l.b16 %v215
    %v224 = vunpack.c.l.b16 %v216
    %v225 = vpack.c.b16 %v222, %v221
    %v226 = vpack.c.b16 %v224, %v223
    %v230 = vsel %vm168, %v212, 0
    %232 = vmatprep.subr.bf16.mxu0 0
    %233 = vmatpush1.bf16.msra.mxu0 %v225
    %234 = vmatprep.subr.bf16.mxu0 0
    %235 = vmatpush1.bf16.msra.mxu0 %v226
    %236 = vmatprep.subr.bf16.mxu0 0
    %237 = vmatpush1.bf16.msra.mxu0 0
    %238 = vmatprep.subr.bf16.mxu0 0
    %239 = vmatpush1.bf16.msra.mxu0 0
    %240 = vmatprep.subr.bf16.mxu0 0
    %241 = vmatpush1.bf16.msra.mxu0 0
    %242 = vmatprep.subr.bf16.mxu0 0
    %243 = vmatpush1.bf16.msra.mxu0 0
    %244 = vmatprep.subr.bf16.mxu0 0
    %245 = vmatpush1.bf16.msra.mxu0 0
    %246 = vmatprep.subr.bf16.mxu0 0
    %247 = vmatpush1.bf16.msra.mxu0 0
    %248 = vmatprep.subr.bf16.mxu0 0
    %249 = vmatpush1.bf16.msra.mxu0 0
    %250 = vmatprep.subr.bf16.mxu0 0
    %251 = vmatpush1.bf16.msra.mxu0 0
    %252 = vmatprep.subr.bf16.mxu0 0
    %253 = vmatpush1.bf16.msra.mxu0 0
    %254 = vmatprep.subr.bf16.mxu0 0
    %255 = vmatpush1.bf16.msra.mxu0 0
    %256 = vmatprep.subr.bf16.mxu0 0
    %257 = vmatpush1.bf16.msra.mxu0 0
    %258 = vmatprep.subr.bf16.mxu0 0
    %259 = vmatpush1.bf16.msra.mxu0 0
    %260 = vmatprep.subr.bf16.mxu0 0
    %261 = vmatpush1.bf16.msra.mxu0 0
    %262 = vmatprep.subr.bf16.mxu0 0
    %263 = vmatpush1.bf16.msra.mxu0 0
    %264 = vmatprep.mubr.bf16.mxu0 0
    %265 = vmatmul.mubr.bf16.gmra.mrb[0].mxu0 %v230
    %v266 = vpop.f32.mrb[0].mxu0
    %v267 = vadd.f32 0.0, %v266
    %v268 = vpop.f32.mrb[0].mxu0
    %v269 = vpop.f32.mrb[0].mxu0
    %v270 = vadd.f32 0.0, %v269
    %v271 = vpop.f32.mrb[0].mxu0
    %272 = vdwg.mxu0
    %v273 = vmul.f32 %v267, 0.25
    %v274 = vmul.f32 %v270, 0.25
    %v275 = vpack.c.bf16 %v270, %v267
    %v276 = vpack.c.bf16 %v274, %v273
    %278 = vrot.lane.b32.xlu0 %v275, 96
    %v279 = vpop.permute.xlu0 %278
    %vm280 = vcmask 130048
    %v282 = vsel %vm280, %v276, 0
    %v285 = vsel %vm280, %v279, 0
    %287 = vmatprep.subr.bf16.mxu0 0
    %288 = vmatpush1.bf16.xpose.msra.mxu0 %v285
    %289 = vmatprep.subr.bf16.mxu0 0
    %290 = vmatpush1.bf16.xpose.msra.mxu0 0
    %291 = vmatprep.subr.bf16.mxu0 0
    %292 = vmatpush1.bf16.xpose.msra.mxu0 0
    %293 = vmatprep.subr.bf16.mxu0 0
    %294 = vmatpush1.bf16.xpose.msra.mxu0 0
    %295 = vmatprep.subr.bf16.mxu0 0
    %296 = vmatpush1.bf16.xpose.msra.mxu0 0
    %297 = vmatprep.subr.bf16.mxu0 0
    %298 = vmatpush1.bf16.xpose.msra.mxu0 0
    %299 = vmatprep.subr.bf16.mxu0 0
    %300 = vmatpush1.bf16.xpose.msra.mxu0 0
    %301 = vmatprep.subr.bf16.mxu0 0
    %302 = vmatpush1.bf16.xpose.msra.mxu0 0
    %303 = vmatprep.subr.bf16.mxu0 0
    %304 = vmatpush1.bf16.xpose.msra.mxu0 0
    %305 = vmatprep.subr.bf16.mxu0 0
    %306 = vmatpush1.bf16.xpose.msra.mxu0 0
    %307 = vmatprep.subr.bf16.mxu0 0
    %308 = vmatpush1.bf16.xpose.msra.mxu0 0
    %309 = vmatprep.subr.bf16.mxu0 0
    %310 = vmatpush1.bf16.xpose.msra.mxu0 0
    %311 = vmatprep.subr.bf16.mxu0 0
    %312 = vmatpush1.bf16.xpose.msra.mxu0 0
    %313 = vmatprep.subr.bf16.mxu0 0
    %314 = vmatpush1.bf16.xpose.msra.mxu0 0
    %315 = vmatprep.subr.bf16.mxu0 0
    %316 = vmatpush1.bf16.xpose.msra.mxu0 0
    %317 = vmatprep.subr.bf16.mxu0 0
    %318 = vmatpush1.bf16.xpose.msra.mxu0 0
    %319 = vmatprep.mubr.bf16.mxu0 0
    %320 = vmatmul.mubr.bf16.gmra.mrb[0].mxu0 %v282
    %v321 = vpop.f32.mrb[0].mxu0
    %v322 = vadd.f32 %v164, %v321
    %v323 = vpop.f32.mrb[0].mxu0
    %v324 = vpop.f32.mrb[0].mxu0
    %v325 = vadd.f32 %v165, %v324
    %v326 = vpop.f32.mrb[0].mxu0
    %327 = vdwg.mxu0
    %v328 = vsel %vm280, %v322, -inf
    %329 = vmax.xlane.f32.xlu0 %v328
    %v330 = vpop.xlane.xlu0 %329
    %v331 = vsel %vm280, %v325, -inf
    %332 = vmax.xlane.f32.xlu0 %v331
    %v333 = vpop.xlane.xlu0 %332
    %v334 = vsub.f32 %v322, %v330
    %v335 = vsub.f32 %v325, %v333
    %v336 = vmul.f32 %v334, 1.442695
    %v337 = vpow.pop %v336
    %v338 = vmul.f32 %v335, 1.442695
    %v339 = vpow.pop %v338
    %v340 = vsel %vm280, %v337, 0.0
    %341 = vadd.xlane.f32.xlu0 %v340
    %v342 = vpop.xlane.xlu0 %341
    %v343 = vsel %vm280, %v339, 0.0
    %344 = vadd.xlane.f32.xlu0 %v343
    %v345 = vpop.xlane.xlu0 %344
    %v346 = vrcp.pop %v342
    %v347 = vrcp.pop %v345
    %v348 = vmul.f32 %v337, %v346
    %v349 = vmul.f32 %v339, %v347
    %v350 = vpack.c.bf16 %v349, %v348
    %351 = vrot.lane.b32.xlu0 %v275, 64
    %v352 = vpop.permute.xlu0 %351
    %v355 = vsel %vm280, %v350, 0
    %357 = vmatprep.subr.bf16.mxu0 0
    %358 = vmatpush1.bf16.msra.mxu0 %v352
    %359 = vmatprep.subr.bf16.mxu0 0
    %360 = vmatpush1.bf16.msra.mxu0 0
    %361 = vmatprep.subr.bf16.mxu0 0
    %362 = vmatpush1.bf16.msra.mxu0 0
    %363 = vmatprep.subr.bf16.mxu0 0
    %364 = vmatpush1.bf16.msra.mxu0 0
    %365 = vmatprep.subr.bf16.mxu0 0
    %366 = vmatpush1.bf16.msra.mxu0 0
    %367 = vmatprep.subr.bf16.mxu0 0
    %368 = vmatpush1.bf16.msra.mxu0 0
    %369 = vmatprep.subr.bf16.mxu0 0
    %370 = vmatpush1.bf16.msra.mxu0 0
    %371 = vmatprep.subr.bf16.mxu0 0
    %372 = vmatpush1.bf16.msra.mxu0 0
    %373 = vmatprep.subr.bf16.mxu0 0
    %374 = vmatpush1.bf16.msra.mxu0 0
    %375 = vmatprep.subr.bf16.mxu0 0
    %376 = vmatpush1.bf16.msra.mxu0 0
    %377 = vmatprep.subr.bf16.mxu0 0
    %378 = vmatpush1.bf16.msra.mxu0 0
    %379 = vmatprep.subr.bf16.mxu0 0
    %380 = vmatpush1.bf16.msra.mxu0 0
    %381 = vmatprep.subr.bf16.mxu0 0
    %382 = vmatpush1.bf16.msra.mxu0 0
    %383 = vmatprep.subr.bf16.mxu0 0
    %384 = vmatpush1.bf16.msra.mxu0 0
    %385 = vmatprep.subr.bf16.mxu0 0
    %386 = vmatpush1.bf16.msra.mxu0 0
    %387 = vmatprep.subr.bf16.mxu0 0
    %388 = vmatpush1.bf16.msra.mxu0 0
    %389 = vmatprep.mubr.bf16.mxu0 0
    %390 = vmatmul.mubr.bf16.gmra.mrb[0].mxu0 %v355
    %v391 = vpop.f32.mrb[0].mxu0
    %v392 = vadd.f32 0.0, %v391
    %v393 = vpop.f32.mrb[0].mxu0
    %v394 = vpop.f32.mrb[0].mxu0
    %v395 = vadd.f32 0.0, %v394
    %v396 = vpop.f32.mrb[0].mxu0
    %397 = vdwg.mxu0
    %v398 = vpack.c.bf16 %v395, %v392
    %v399 = vld [vmem:[%s6] sm:$0xf]
    %v400 = vld [vmem:[%s6 + $0x4] sm:$0xf]
    %402 = vrot.lane.b32.xlu0 %v276, 112
    %v403 = vpop.permute.xlu0 %402
    %404 = vrot.lane.b32.xlu0 %v275, 80
    %v405 = vpop.permute.xlu0 %404
    %v407 = vsel %vm280, %v403, 0
    %v410 = vsel %vm280, %v405, 0
    %412 = vmatprep.subr.bf16.mxu0 0
    %413 = vmatpush1.bf16.xpose.msra.mxu0 %v410
    %414 = vmatprep.subr.bf16.mxu0 0
    %415 = vmatpush1.bf16.xpose.msra.mxu0 0
    %416 = vmatprep.subr.bf16.mxu0 0
    %417 = vmatpush1.bf16.xpose.msra.mxu0 0
    %418 = vmatprep.subr.bf16.mxu0 0
    %419 = vmatpush1.bf16.xpose.msra.mxu0 0
    %420 = vmatprep.subr.bf16.mxu0 0
    %421 = vmatpush1.bf16.xpose.msra.mxu0 0
    %422 = vmatprep.subr.bf16.mxu0 0
    %423 = vmatpush1.bf16.xpose.msra.mxu0 0
    %424 = vmatprep.subr.bf16.mxu0 0
    %425 = vmatpush1.bf16.xpose.msra.mxu0 0
    %426 = vmatprep.subr.bf16.mxu0 0
    %427 = vmatpush1.bf16.xpose.msra.mxu0 0
    %428 = vmatprep.subr.bf16.mxu0 0
    %429 = vmatpush1.bf16.xpose.msra.mxu0 0
    %430 = vmatprep.subr.bf16.mxu0 0
    %431 = vmatpush1.bf16.xpose.msra.mxu0 0
    %432 = vmatprep.subr.bf16.mxu0 0
    %433 = vmatpush1.bf16.xpose.msra.mxu0 0
    %434 = vmatprep.subr.bf16.mxu0 0
    %435 = vmatpush1.bf16.xpose.msra.mxu0 0
    %436 = vmatprep.subr.bf16.mxu0 0
    %437 = vmatpush1.bf16.xpose.msra.mxu0 0
    %438 = vmatprep.subr.bf16.mxu0 0
    %439 = vmatpush1.bf16.xpose.msra.mxu0 0
    %440 = vmatprep.subr.bf16.mxu0 0
    %441 = vmatpush1.bf16.xpose.msra.mxu0 0
    %442 = vmatprep.subr.bf16.mxu0 0
    %443 = vmatpush1.bf16.xpose.msra.mxu0 0
    %444 = vmatprep.mubr.bf16.mxu0 0
    %445 = vmatmul.mubr.bf16.gmra.mrb[0].mxu0 %v407
    %v446 = vpop.f32.mrb[0].mxu0
    %v447 = vadd.f32 %v164, %v446
    %v448 = vpop.f32.mrb[0].mxu0
    %v449 = vpop.f32.mrb[0].mxu0
    %v450 = vadd.f32 %v165, %v449
    %v451 = vpop.f32.mrb[0].mxu0
    %452 = vdwg.mxu0
    %v453 = vsel %vm280, %v447, -inf
    %454 = vmax.xlane.f32.xlu0 %v453
    %v455 = vpop.xlane.xlu0 %454
    %v456 = vsel %vm280, %v450, -inf
    %457 = vmax.xlane.f32.xlu0 %v456
    %v458 = vpop.xlane.xlu0 %457
    %v459 = vsub.f32 %v447, %v455
    %v460 = vsub.f32 %v450, %v458
    %v461 = vmul.f32 %v459, 1.442695
    %v462 = vpow.pop %v461
    %v463 = vmul.f32 %v460, 1.442695
    %v464 = vpow.pop %v463
    %v465 = vsel %vm280, %v462, 0.0
    %466 = vadd.xlane.f32.xlu0 %v465
    %v467 = vpop.xlane.xlu0 %466
    %v468 = vsel %vm280, %v464, 0.0
    %469 = vadd.xlane.f32.xlu0 %v468
    %v470 = vpop.xlane.xlu0 %469
    %v471 = vrcp.pop %v467
    %v472 = vrcp.pop %v470
    %v473 = vmul.f32 %v462, %v471
    %v474 = vmul.f32 %v464, %v472
    %v475 = vpack.c.bf16 %v474, %v473
    %476 = vrot.lane.b32.xlu0 %v275, 48
    %v477 = vpop.permute.xlu0 %476
    %v480 = vsel %vm280, %v475, 0
    %482 = vmatprep.subr.bf16.mxu0 0
    %483 = vmatpush1.bf16.msra.mxu0 %v477
    %484 = vmatprep.subr.bf16.mxu0 0
    %485 = vmatpush1.bf16.msra.mxu0 0
    %486 = vmatprep.subr.bf16.mxu0 0
    %487 = vmatpush1.bf16.msra.mxu0 0
    %488 = vmatprep.subr.bf16.mxu0 0
    %489 = vmatpush1.bf16.msra.mxu0 0
    %490 = vmatprep.subr.bf16.mxu0 0
    %491 = vmatpush1.bf16.msra.mxu0 0
    %492 = vmatprep.subr.bf16.mxu0 0
    %493 = vmatpush1.bf16.msra.mxu0 0
    %494 = vmatprep.subr.bf16.mxu0 0
    %495 = vmatpush1.bf16.msra.mxu0 0
    %496 = vmatprep.subr.bf16.mxu0 0
    %497 = vmatpush1.bf16.msra.mxu0 0
    %498 = vmatprep.subr.bf16.mxu0 0
    %499 = vmatpush1.bf16.msra.mxu0 0
    %500 = vmatprep.subr.bf16.mxu0 0
    %501 = vmatpush1.bf16.msra.mxu0 0
    %502 = vmatprep.subr.bf16.mxu0 0
    %503 = vmatpush1.bf16.msra.mxu0 0
    %504 = vmatprep.subr.bf16.mxu0 0
    %505 = vmatpush1.bf16.msra.mxu0 0
    %506 = vmatprep.subr.bf16.mxu0 0
    %507 = vmatpush1.bf16.msra.mxu0 0
    %508 = vmatprep.subr.bf16.mxu0 0
    %509 = vmatpush1.bf16.msra.mxu0 0
    %510 = vmatprep.subr.bf16.mxu0 0
    %511 = vmatpush1.bf16.msra.mxu0 0
    %512 = vmatprep.subr.bf16.mxu0 0
    %513 = vmatpush1.bf16.msra.mxu0 0
    %514 = vmatprep.mubr.bf16.mxu0 0
    %515 = vmatmul.mubr.bf16.gmra.mrb[0].mxu0 %v480
    %v516 = vpop.f32.mrb[0].mxu0
    %v517 = vadd.f32 0.0, %v516
    %v518 = vpop.f32.mrb[0].mxu0
    %v519 = vpop.f32.mrb[0].mxu0
    %v520 = vadd.f32 0.0, %v519
    %v521 = vpop.f32.mrb[0].mxu0
    %522 = vdwg.mxu0
    %v523 = vpack.c.bf16 %v520, %v517
    %s524 = scalar_lea.vmem %s6, 8
    %v525 = vld [vmem:[%s524] sm:$0xf]
    %v526 = vld [vmem:[%s524 + $0x4] sm:$0xf]
    %v529 = vunpack.c.l.b16 %v525
    %v530 = vunpack.c.l.b16 %v526
    %v531 = vpack.c.b16 %v530, %v529
    %v534 = vsel %vm280, %v523, 0
    %536 = vmatprep.subr.bf16.mxu0 0
    %537 = vmatpush1.bf16.msra.mxu0 %v531
    %538 = vmatprep.subr.bf16.mxu0 0
    %539 = vmatpush1.bf16.msra.mxu0 0
    %540 = vmatprep.subr.bf16.mxu0 0
    %541 = vmatpush1.bf16.msra.mxu0 0
    %542 = vmatprep.subr.bf16.mxu0 0
    %543 = vmatpush1.bf16.msra.mxu0 0
    %544 = vmatprep.subr.bf16.mxu0 0
    %545 = vmatpush1.bf16.msra.mxu0 0
    %546 = vmatprep.subr.bf16.mxu0 0
    %547 = vmatpush1.bf16.msra.mxu0 0
    %548 = vmatprep.subr.bf16.mxu0 0
    %549 = vmatpush1.bf16.msra.mxu0 0
    %550 = vmatprep.subr.bf16.mxu0 0
    %551 = vmatpush1.bf16.msra.mxu0 0
    %552 = vmatprep.subr.bf16.mxu0 0
    %553 = vmatpush1.bf16.msra.mxu0 0
    %554 = vmatprep.subr.bf16.mxu0 0
    %555 = vmatpush1.bf16.msra.mxu0 0
    %556 = vmatprep.subr.bf16.mxu0 0
    %557 = vmatpush1.bf16.msra.mxu0 0
    %558 = vmatprep.subr.bf16.mxu0 0
    %559 = vmatpush1.bf16.msra.mxu0 0
    %560 = vmatprep.subr.bf16.mxu0 0
    %561 = vmatpush1.bf16.msra.mxu0 0
    %562 = vmatprep.subr.bf16.mxu0 0
    %563 = vmatpush1.bf16.msra.mxu0 0
    %564 = vmatprep.subr.bf16.mxu0 0
    %565 = vmatpush1.bf16.msra.mxu0 0
    %566 = vmatprep.subr.bf16.mxu0 0
    %567 = vmatpush1.bf16.msra.mxu0 0
    %568 = vmatprep.mubr.bf16.mxu0 0
    %569 = vmatmul.mubr.bf16.gmra.mrb[0].mxu0 %v534
    %v570 = vpop.f32.mrb[0].mxu0
    %v571 = vadd.f32 0.0, %v570
    %v572 = vpop.f32.mrb[0].mxu0
    %v573 = vpop.f32.mrb[0].mxu0
    %v574 = vadd.f32 0.0, %v573
    %v575 = vpop.f32.mrb[0].mxu0
    %576 = vdwg.mxu0
    %v579 = vunpack.c.l.b16 %v399
    %v580 = vunpack.c.l.b16 %v400
    %v581 = vpack.c.b16 %v580, %v579
    %v584 = vsel %vm280, %v398, 0
    %586 = vmatprep.subr.bf16.mxu0 0
    %587 = vmatpush1.bf16.msra.mxu0 %v581
    %588 = vmatprep.subr.bf16.mxu0 0
    %589 = vmatpush1.bf16.msra.mxu0 0
    %590 = vmatprep.subr.bf16.mxu0 0
    %591 = vmatpush1.bf16.msra.mxu0 0
    %592 = vmatprep.subr.bf16.mxu0 0
    %593 = vmatpush1.bf16.msra.mxu0 0
    %594 = vmatprep.subr.bf16.mxu0 0
    %595 = vmatpush1.bf16.msra.mxu0 0
    %596 = vmatprep.subr.bf16.mxu0 0
    %597 = vmatpush1.bf16.msra.mxu0 0
    %598 = vmatprep.subr.bf16.mxu0 0
    %599 = vmatpush1.bf16.msra.mxu0 0
    %600 = vmatprep.subr.bf16.mxu0 0
    %601 = vmatpush1.bf16.msra.mxu0 0
    %602 = vmatprep.subr.bf16.mxu0 0
    %603 = vmatpush1.bf16.msra.mxu0 0
    %604 = vmatprep.subr.bf16.mxu0 0
    %605 = vmatpush1.bf16.msra.mxu0 0
    %606 = vmatprep.subr.bf16.mxu0 0
    %607 = vmatpush1.bf16.msra.mxu0 0
    %608 = vmatprep.subr.bf16.mxu0 0
    %609 = vmatpush1.bf16.msra.mxu0 0
    %610 = vmatprep.subr.bf16.mxu0 0
    %611 = vmatpush1.bf16.msra.mxu0 0
    %612 = vmatprep.subr.bf16.mxu0 0
    %613 = vmatpush1.bf16.msra.mxu0 0
    %614 = vmatprep.subr.bf16.mxu0 0
    %615 = vmatpush1.bf16.msra.mxu0 0
    %616 = vmatprep.subr.bf16.mxu0 0
    %617 = vmatpush1.bf16.msra.mxu0 0
    %618 = vmatprep.mubr.bf16.mxu0 0
    %619 = vmatmul.mubr.bf16.gmra.mrb[0].mxu0 %v584
    %v620 = vpop.f32.mrb[0].mxu0
    %v621 = vadd.f32 %v571, %v620
    %v622 = vpop.f32.mrb[0].mxu0
    %v623 = vpop.f32.mrb[0].mxu0
    %v624 = vadd.f32 %v574, %v623
    %v625 = vpop.f32.mrb[0].mxu0
    %626 = vdwg.mxu0
    %v627 = vadd.f32 %v158, %v621
    %v628 = vadd.f32 %v161, %v624
    %v629 = vld [vmem:[%s7] sm:$0x1]
    %v630 = vld [vmem:[%s8] sm:$0x1]
    %v631 = vsel %vm168, %v627, 0.0
    %632 = vadd.xlane.f32.xlu0 %v631
    %v633 = vpop.xlane.xlu0 %632
    %v634 = vsel %vm168, %v628, 0.0
    %635 = vadd.xlane.f32.xlu0 %v634
    %v636 = vpop.xlane.xlu0 %635
    %v637 = vmul.f32 %v633, %v175
    %v638 = vmul.f32 %v636, %v175
    %v639 = vsub.f32 %v627, %v637
    %v640 = vsub.f32 %v628, %v638
    %v641 = vmul.f32 %v639, %v639
    %v642 = vmul.f32 %v640, %v640
    %v643 = vsel %vm168, %v641, 0.0
    %644 = vadd.xlane.f32.xlu0 %v643
    %v645 = vpop.xlane.xlu0 %644
    %v646 = vsel %vm168, %v642, 0.0
    %647 = vadd.xlane.f32.xlu0 %v646
    %v648 = vpop.xlane.xlu0 %647
    %v649 = vmul.f32 %v645, %v175
    %v650 = vmul.f32 %v648, %v175
    %v651 = vadd.f32 %v649, 1e-05
    %v652 = vadd.f32 %v650, 1e-05
    %v653 = vrsqrt.pop %v651
    %v654 = vrsqrt.pop %v652
    %v655 = vmul.f32 %v639, %v653
    %v656 = vmul.f32 %v640, %v654
    %v658 = vlaneseq
    %v659 = vshrl.u32 %v658, 7
    %v660 = vsub.s32 0, %v659
    %v661 = vrot.slane %v629, %v660
    %v663 = vmul.f32 %v655, %v661
    %v664 = vmul.f32 %v656, %v661
    %v666 = vlaneseq
    %v667 = vshrl.u32 %v666, 7
    %v668 = vsub.s32 0, %v667
    %v669 = vrot.slane %v630, %v668
    %v671 = vadd.f32 %v663, %v669
    %v672 = vadd.f32 %v664, %v669
    %v673 = vpack.c.bf16 %v672, %v671
    %v674 = vld [vmem:[%s9] sm:$0xf]
    %v675 = vld [vmem:[%s9 + $0x4] sm:$0xf]
    %v676 = vld [vmem:[%s9 + $0x8] sm:$0xf]
    %v677 = vld [vmem:[%s9 + $0xc] sm:$0xf]
    %v682 = vunpack.c.l.b16 %v674
    %v683 = vunpack.c.l.b16 %v675
    %v684 = vunpack.c.l.b16 %v676
    %v685 = vunpack.c.l.b16 %v677
    %v686 = vpack.c.b16 %v683, %v682
    %v687 = vpack.c.b16 %v685, %v684
    %v691 = vsel %vm168, %v673, 0
    %693 = vmatprep.subr.bf16.mxu0 0
    %694 = vmatpush1.bf16.msra.mxu0 %v686
    %695 = vmatprep.subr.bf16.mxu0 0
    %696 = vmatpush1.bf16.msra.mxu0 %v687
    %697 = vmatprep.subr.bf16.mxu0 0
    %698 = vmatpush1.bf16.msra.mxu0 0
    %699 = vmatprep.subr.bf16.mxu0 0
    %700 = vmatpush1.bf16.msra.mxu0 0
    %701 = vmatprep.subr.bf16.mxu0 0
    %702 = vmatpush1.bf16.msra.mxu0 0
    %703 = vmatprep.subr.bf16.mxu0 0
    %704 = vmatpush1.bf16.msra.mxu0 0
    %705 = vmatprep.subr.bf16.mxu0 0
    %706 = vmatpush1.bf16.msra.mxu0 0
    %707 = vmatprep.subr.bf16.mxu0 0
    %708 = vmatpush1.bf16.msra.mxu0 0
    %709 = vmatprep.subr.bf16.mxu0 0
    %710 = vmatpush1.bf16.msra.mxu0 0
    %711 = vmatprep.subr.bf16.mxu0 0
    %712 = vmatpush1.bf16.msra.mxu0 0
    %713 = vmatprep.subr.bf16.mxu0 0
    %714 = vmatpush1.bf16.msra.mxu0 0
    %715 = vmatprep.subr.bf16.mxu0 0
    %716 = vmatpush1.bf16.msra.mxu0 0
    %717 = vmatprep.subr.bf16.mxu0 0
    %718 = vmatpush1.bf16.msra.mxu0 0
    %719 = vmatprep.subr.bf16.mxu0 0
    %720 = vmatpush1.bf16.msra.mxu0 0
    %721 = vmatprep.subr.bf16.mxu0 0
    %722 = vmatpush1.bf16.msra.mxu0 0
    %723 = vmatprep.subr.bf16.mxu0 0
    %724 = vmatpush1.bf16.msra.mxu0 0
    %725 = vmatprep.mubr.bf16.mxu0 0
    %726 = vmatmul.mubr.bf16.gmra.mrb[0].mxu0 %v691
    %v727 = vpop.f32.mrb[0].mxu0
    %v728 = vadd.f32 0.0, %v727
    %v729 = vpop.f32.mrb[0].mxu0
    %v730 = vpop.f32.mrb[0].mxu0
    %v731 = vadd.f32 0.0, %v730
    %v732 = vpop.f32.mrb[0].mxu0
    %733 = vdwg.mxu0
    %v734 = vmul.f32 %v728, %v728
    %v735 = vmul.f32 %v731, %v731
    %v736 = vmul.f32 %v728, %v734
    %v737 = vmul.f32 %v731, %v735
    %v738 = vmul.f32 %v736, 0.044715
    %v739 = vmul.f32 %v737, 0.044715
    %v740 = vadd.f32 %v728, %v738
    %v741 = vadd.f32 %v731, %v739
    %v742 = vmul.f32 %v740, 0.7978846
    %v743 = vmul.f32 %v741, 0.7978846
    %v744 = vtanh.pop %v742
    %v745 = vtanh.pop %v743
    %v746 = vadd.f32 %v744, 1.0
    %v747 = vadd.f32 %v745, 1.0
    %v748 = vmul.f32 %v746, 0.5
    %v749 = vmul.f32 %v747, 0.5
    %v750 = vmul.f32 %v728, %v748
    %v751 = vmul.f32 %v731, %v749
    %v752 = vpack.c.bf16 %v751, %v750
    %v753 = vld [vmem:[%s10] sm:$0xf]
    %v754 = vld [vmem:[%s10 + $0x4] sm:$0xf]
    %v755 = vld [vmem:[%s10 + $0x8] sm:$0xf]
    %v756 = vld [vmem:[%s10 + $0xc] sm:$0xf]
    %v757 = vld [vmem:[%s10 + $0x10] sm:$0xf]
    %v758 = vld [vmem:[%s10 + $0x14] sm:$0xf]
    %v759 = vld [vmem:[%s10 + $0x18] sm:$0xf]
    %v760 = vld [vmem:[%s10 + $0x1c] sm:$0xf]
    %v769 = vunpack.c.l.b16 %v753
    %v770 = vunpack.c.l.b16 %v754
    %v771 = vunpack.c.l.b16 %v755
    %v772 = vunpack.c.l.b16 %v756
    %v773 = vunpack.c.l.b16 %v757
    %v774 = vunpack.c.l.b16 %v758
    %v775 = vunpack.c.l.b16 %v759
    %v776 = vunpack.c.l.b16 %v760
    %v777 = vpack.c.b16 %v770, %v769
    %v778 = vpack.c.b16 %v772, %v771
    %v779 = vpack.c.b16 %v774, %v773
    %v780 = vpack.c.b16 %v776, %v775
    %vm785 = vcmask 523264
    %v787 = vsel %vm785, %v752, 0
    %789 = vmatprep.subr.bf16.mxu0 0
    %790 = vmatpush1.bf16.msra.mxu0 %v777
    %791 = vmatprep.subr.bf16.mxu0 0
    %792 = vmatpush1.bf16.msra.mxu0 %v778
    %793 = vmatprep.subr.bf16.mxu0 0
    %794 = vmatpush1.bf16.msra.mxu0 %v779
    %795 = vmatprep.subr.bf16.mxu0 0
    %796 = vmatpush1.bf16.msra.mxu0 %v780
    %797 = vmatprep.subr.bf16.mxu0 0
    %798 = vmatpush1.bf16.msra.mxu0 0
    %799 = vmatprep.subr.bf16.mxu0 0
    %800 = vmatpush1.bf16.msra.mxu0 0
    %801 = vmatprep.subr.bf16.mxu0 0
    %802 = vmatpush1.bf16.msra.mxu0 0
    %803 = vmatprep.subr.bf16.mxu0 0
    %804 = vmatpush1.bf16.msra.mxu0 0
    %805 = vmatprep.subr.bf16.mxu0 0
    %806 = vmatpush1.bf16.msra.mxu0 0
    %807 = vmatprep.subr.bf16.mxu0 0
    %808 = vmatpush1.bf16.msra.mxu0 0
    %809 = vmatprep.subr.bf16.mxu0 0
    %810 = vmatpush1.bf16.msra.mxu0 0
    %811 = vmatprep.subr.bf16.mxu0 0
    %812 = vmatpush1.bf16.msra.mxu0 0
    %813 = vmatprep.subr.bf16.mxu0 0
    %814 = vmatpush1.bf16.msra.mxu0 0
    %815 = vmatprep.subr.bf16.mxu0 0
    %816 = vmatpush1.bf16.msra.mxu0 0
    %817 = vmatprep.subr.bf16.mxu0 0
    %818 = vmatpush1.bf16.msra.mxu0 0
    %819 = vmatprep.subr.bf16.mxu0 0
    %820 = vmatpush1.bf16.msra.mxu0 0
    %821 = vmatprep.mubr.bf16.mxu0 0
    %822 = vmatmul.mubr.bf16.gmra.mrb[0].mxu0 %v787
    %v823 = vpop.f32.mrb[0].mxu0
    %v824 = vadd.f32 0.0, %v823
    %v825 = vpop.f32.mrb[0].mxu0
    %v826 = vpop.f32.mrb[0].mxu0
    %v827 = vadd.f32 0.0, %v826
    %v828 = vpop.f32.mrb[0].mxu0
    %829 = vdwg.mxu0
    %v830 = vadd.f32 %v627, %v824
    %v831 = vadd.f32 %v628, %v827
    %s832 = scalar_lea.vmem %s3, 1
    %v833 = vld [vmem:[%s832] sm:$0x1]
    %s834 = scalar_lea.vmem %s4, 1
    %v835 = vld [vmem:[%s834] sm:$0x1]
    %v836 = vsel %vm168, %v830, 0.0
    %837 = vadd.xlane.f32.xlu0 %v836
    %v838 = vpop.xlane.xlu0 %837
    %v839 = vsel %vm168, %v831, 0.0
    %840 = vadd.xlane.f32.xlu0 %v839
    %v841 = vpop.xlane.xlu0 %840
    %v842 = vmul.f32 %v838, %v175
    %v843 = vmul.f32 %v841, %v175
    %v844 = vsub.f32 %v830, %v842
    %v845 = vsub.f32 %v831, %v843
    %v846 = vmul.f32 %v844, %v844
    %v847 = vmul.f32 %v845, %v845
    %v848 = vsel %vm168, %v846, 0.0
    %849 = vadd.xlane.f32.xlu0 %v848
    %v850 = vpop.xlane.xlu0 %849
    %v851 = vsel %vm168, %v847, 0.0
    %852 = vadd.xlane.f32.xlu0 %v851
    %v853 = vpop.xlane.xlu0 %852
    %v854 = vmul.f32 %v850, %v175
    %v855 = vmul.f32 %v853, %v175
    %v856 = vadd.f32 %v854, 1e-05
    %v857 = vadd.f32 %v855, 1e-05
    %v858 = vrsqrt.pop %v856
    %v859 = vrsqrt.pop %v857
    %v860 = vmul.f32 %v844, %v858
    %v861 = vmul.f32 %v845, %v859
    %v863 = vlaneseq
    %v864 = vshrl.u32 %v863, 7
    %v865 = vsub.s32 0, %v864
    %v866 = vrot.slane %v833, %v865
    %v868 = vmul.f32 %v860, %v866
    %v869 = vmul.f32 %v861, %v866
    %v871 = vlaneseq
    %v872 = vshrl.u32 %v871, 7
    %v873 = vsub.s32 0, %v872
    %v874 = vrot.slane %v835, %v873
    %v876 = vadd.f32 %v868, %v874
    %v877 = vadd.f32 %v869, %v874
    %v878 = vpack.c.bf16 %v877, %v876
    %s879 = scalar_lea.vmem %s5, 16
    %v880 = vld [vmem:[%s879] sm:$0xf]
    %v881 = vld [vmem:[%s879 + $0x4] sm:$0xf]
    %v882 = vld [vmem:[%s879 + $0x8] sm:$0xf]
    %v883 = vld [vmem:[%s879 + $0xc] sm:$0xf]
    %v888 = vunpack.c.l.b16 %v880
    %v889 = vunpack.c.l.b16 %v881
    %v890 = vunpack.c.l.b16 %v882
    %v891 = vunpack.c.l.b16 %v883
    %v892 = vpack.c.b16 %v889, %v888
    %v893 = vpack.c.b16 %v891, %v890
    %v897 = vsel %vm168, %v878, 0
    %899 = vmatprep.subr.bf16.mxu0 0
    %900 = vmatpush1.bf16.msra.mxu0 %v892
    %901 = vmatprep.subr.bf16.mxu0 0
    %902 = vmatpush1.bf16.msra.mxu0 %v893
    %903 = vmatprep.subr.bf16.mxu0 0
    %904 = vmatpush1.bf16.msra.mxu0 0
    %905 = vmatprep.subr.bf16.mxu0 0
    %906 = vmatpush1.bf16.msra.mxu0 0
    %907 = vmatprep.subr.bf16.mxu0 0
    %908 = vmatpush1.bf16.msra.mxu0 0
    %909 = vmatprep.subr.bf16.mxu0 0
    %910 = vmatpush1.bf16.msra.mxu0 0
    %911 = vmatprep.subr.bf16.mxu0 0
    %912 = vmatpush1.bf16.msra.mxu0 0
    %913 = vmatprep.subr.bf16.mxu0 0
    %914 = vmatpush1.bf16.msra.mxu0 0
    %915 = vmatprep.subr.bf16.mxu0 0
    %916 = vmatpush1.bf16.msra.mxu0 0
    %917 = vmatprep.subr.bf16.mxu0 0
    %918 = vmatpush1.bf16.msra.mxu0 0
    %919 = vmatprep.subr.bf16.mxu0 0
    %920 = vmatpush1.bf16.msra.mxu0 0
    %921 = vmatprep.subr.bf16.mxu0 0
    %922 = vmatpush1.bf16.msra.mxu0 0
    %923 = vmatprep.subr.bf16.mxu0 0
    %924 = vmatpush1.bf16.msra.mxu0 0
    %925 = vmatprep.subr.bf16.mxu0 0
    %926 = vmatpush1.bf16.msra.mxu0 0
    %927 = vmatprep.subr.bf16.mxu0 0
    %928 = vmatpush1.bf16.msra.mxu0 0
    %929 = vmatprep.subr.bf16.mxu0 0
    %930 = vmatpush1.bf16.msra.mxu0 0
    %931 = vmatprep.mubr.bf16.mxu0 0
    %932 = vmatmul.mubr.bf16.gmra.mrb[0].mxu0 %v897
    %v933 = vpop.f32.mrb[0].mxu0
    %v934 = vadd.f32 0.0, %v933
    %v935 = vpop.f32.mrb[0].mxu0
    %v936 = vpop.f32.mrb[0].mxu0
    %v937 = vadd.f32 0.0, %v936
    %v938 = vpop.f32.mrb[0].mxu0
    %939 = vdwg.mxu0
    %v940 = vmul.f32 %v934, 0.25
    %v941 = vmul.f32 %v937, 0.25
    %v942 = vpack.c.bf16 %v937, %v934
    %v943 = vpack.c.bf16 %v941, %v940
    %945 = vrot.lane.b32.xlu0 %v942, 96
    %v946 = vpop.permute.xlu0 %945
    %v948 = vsel %vm280, %v943, 0
    %v951 = vsel %vm280, %v946, 0
    %953 = vmatprep.subr.bf16.mxu0 0
    %954 = vmatpush1.bf16.xpose.msra.mxu0 %v951
    %955 = vmatprep.subr.bf16.mxu0 0
    %956 = vmatpush1.bf16.xpose.msra.mxu0 0
    %957 = vmatprep.subr.bf16.mxu0 0
    %958 = vmatpush1.bf16.xpose.msra.mxu0 0
    %959 = vmatprep.subr.bf16.mxu0 0
    %960 = vmatpush1.bf16.xpose.msra.mxu0 0
    %961 = vmatprep.subr.bf16.mxu0 0
    %962 = vmatpush1.bf16.xpose.msra.mxu0 0
    %963 = vmatprep.subr.bf16.mxu0 0
    %964 = vmatpush1.bf16.xpose.msra.mxu0 0
    %965 = vmatprep.subr.bf16.mxu0 0
    %966 = vmatpush1.bf16.xpose.msra.mxu0 0
    %967 = vmatprep.subr.bf16.mxu0 0
    %968 = vmatpush1.bf16.xpose.msra.mxu0 0
    %969 = vmatprep.subr.bf16.mxu0 0
    %970 = vmatpush1.bf16.xpose.msra.mxu0 0
    %971 = vmatprep.subr.bf16.mxu0 0
    %972 = vmatpush1.bf16.xpose.msra.mxu0 0
    %973 = vmatprep.subr.bf16.mxu0 0
    %974 = vmatpush1.bf16.xpose.msra.mxu0 0
    %975 = vmatprep.subr.bf16.mxu0 0
    %976 = vmatpush1.bf16.xpose.msra.mxu0 0
    %977 = vmatprep.subr.bf16.mxu0 0
    %978 = vmatpush1.bf16.xpose.msra.mxu0 0
    %979 = vmatprep.subr.bf16.mxu0 0
    %980 = vmatpush1.bf16.xpose.msra.mxu0 0
    %981 = vmatprep.subr.bf16.mxu0 0
    %982 = vmatpush1.bf16.xpose.msra.mxu0 0
    %983 = vmatprep.subr.bf16.mxu0 0
    %984 = vmatpush1.bf16.xpose.msra.mxu0 0
    %985 = vmatprep.mubr.bf16.mxu0 0
    %986 = vmatmul.mubr.bf16.gmra.mrb[0].mxu0 %v948
    %v987 = vpop.f32.mrb[0].mxu0
    %v988 = vadd.f32 %v164, %v987
    %v989 = vpop.f32.mrb[0].mxu0
    %v990 = vpop.f32.mrb[0].mxu0
    %v991 = vadd.f32 %v165, %v990
    %v992 = vpop.f32.mrb[0].mxu0
    %993 = vdwg.mxu0
    %v994 = vsel %vm280, %v988, -inf
    %995 = vmax.xlane.f32.xlu0 %v994
    %v996 = vpop.xlane.xlu0 %995
    %v997 = vsel %vm280, %v991, -inf
    %998 = vmax.xlane.f32.xlu0 %v997
    %v999 = vpop.xlane.xlu0 %998
    %v1000 = vsub.f32 %v988, %v996
    %v1001 = vsub.f32 %v991, %v999
    %v1002 = vmul.f32 %v1000, 1.442695
    %v1003 = vpow.pop %v1002
    %v1004 = vmul.f32 %v1001, 1.442695
    %v1005 = vpow.pop %v1004
    %v1006 = vsel %vm280, %v1003, 0.0
    %1007 = vadd.xlane.f32.xlu0 %v1006
    %v1008 = vpop.xlane.xlu0 %1007
    %v1009 = vsel %vm280, %v1005, 0.0
    %1010 = vadd.xlane.f32.xlu0 %v1009
    %v1011 = vpop.xlane.xlu0 %1010
    %v1012 = vrcp.pop %v1008
    %v1013 = vrcp.pop %v1011
    %v1014 = vmul.f32 %v1003, %v1012
    %v1015 = vmul.f32 %v1005, %v1013
    %v1016 = vpack.c.bf16 %v1015, %v1014
    %1017 = vrot.lane.b32.xlu0 %v942, 64
    %v1018 = vpop.permute.xlu0 %1017
    %v1021 = vsel %vm280, %v1016, 0
    %1023 = vmatprep.subr.bf16.mxu0 0
    %1024 = vmatpush1.bf16.msra.mxu0 %v1018
    %1025 = vmatprep.subr.bf16.mxu0 0
    %1026 = vmatpush1.bf16.msra.mxu0 0
    %1027 = vmatprep.subr.bf16.mxu0 0
    %1028 = vmatpush1.bf16.msra.mxu0 0
    %1029 = vmatprep.subr.bf16.mxu0 0
    %1030 = vmatpush1.bf16.msra.mxu0 0
    %1031 = vmatprep.subr.bf16.mxu0 0
    %1032 = vmatpush1.bf16.msra.mxu0 0
    %1033 = vmatprep.subr.bf16.mxu0 0
    %1034 = vmatpush1.bf16.msra.mxu0 0
    %1035 = vmatprep.subr.bf16.mxu0 0
    %1036 = vmatpush1.bf16.msra.mxu0 0
    %1037 = vmatprep.subr.bf16.mxu0 0
    %1038 = vmatpush1.bf16.msra.mxu0 0
    %1039 = vmatprep.subr.bf16.mxu0 0
    %1040 = vmatpush1.bf16.msra.mxu0 0
    %1041 = vmatprep.subr.bf16.mxu0 0
    %1042 = vmatpush1.bf16.msra.mxu0 0
    %1043 = vmatprep.subr.bf16.mxu0 0
    %1044 = vmatpush1.bf16.msra.mxu0 0
    %1045 = vmatprep.subr.bf16.mxu0 0
    %1046 = vmatpush1.bf16.msra.mxu0 0
    %1047 = vmatprep.subr.bf16.mxu0 0
    %1048 = vmatpush1.bf16.msra.mxu0 0
    %1049 = vmatprep.subr.bf16.mxu0 0
    %1050 = vmatpush1.bf16.msra.mxu0 0
    %1051 = vmatprep.subr.bf16.mxu0 0
    %1052 = vmatpush1.bf16.msra.mxu0 0
    %1053 = vmatprep.subr.bf16.mxu0 0
    %1054 = vmatpush1.bf16.msra.mxu0 0
    %1055 = vmatprep.mubr.bf16.mxu0 0
    %1056 = vmatmul.mubr.bf16.gmra.mrb[0].mxu0 %v1021
    %v1057 = vpop.f32.mrb[0].mxu0
    %v1058 = vadd.f32 0.0, %v1057
    %v1059 = vpop.f32.mrb[0].mxu0
    %v1060 = vpop.f32.mrb[0].mxu0
    %v1061 = vadd.f32 0.0, %v1060
    %v1062 = vpop.f32.mrb[0].mxu0
    %1063 = vdwg.mxu0
    %v1064 = vpack.c.bf16 %v1061, %v1058
    %s1065 = scalar_lea.vmem %s6, 16
    %v1066 = vld [vmem:[%s1065] sm:$0xf]
    %v1067 = vld [vmem:[%s1065 + $0x4] sm:$0xf]
    %1069 = vrot.lane.b32.xlu0 %v943, 112
    %v1070 = vpop.permute.xlu0 %1069
    %1071 = vrot.lane.b32.xlu0 %v942, 80
    %v1072 = vpop.permute.xlu0 %1071
    %v1074 = vsel %vm280, %v1070, 0
    %v1077 = vsel %vm280, %v1072, 0
    %1079 = vmatprep.subr.bf16.mxu0 0
    %1080 = vmatpush1.bf16.xpose.msra.mxu0 %v1077
    %1081 = vmatprep.subr.bf16.mxu0 0
    %1082 = vmatpush1.bf16.xpose.msra.mxu0 0
    %1083 = vmatprep.subr.bf16.mxu0 0
    %1084 = vmatpush1.bf16.xpose.msra.mxu0 0
    %1085 = vmatprep.subr.bf16.mxu0 0
    %1086 = vmatpush1.bf16.xpose.msra.mxu0 0
    %1087 = vmatprep.subr.bf16.mxu0 0
    %1088 = vmatpush1.bf16.xpose.msra.mxu0 0
    %1089 = vmatprep.subr.bf16.mxu0 0
    %1090 = vmatpush1.bf16.xpose.msra.mxu0 0
    %1091 = vmatprep.subr.bf16.mxu0 0
    %1092 = vmatpush1.bf16.xpose.msra.mxu0 0
    %1093 = vmatprep.subr.bf16.mxu0 0
    %1094 = vmatpush1.bf16.xpose.msra.mxu0 0
    %1095 = vmatprep.subr.bf16.mxu0 0
    %1096 = vmatpush1.bf16.xpose.msra.mxu0 0
    %1097 = vmatprep.subr.bf16.mxu0 0
    %1098 = vmatpush1.bf16.xpose.msra.mxu0 0
    %1099 = vmatprep.subr.bf16.mxu0 0
    %1100 = vmatpush1.bf16.xpose.msra.mxu0 0
    %1101 = vmatprep.subr.bf16.mxu0 0
    %1102 = vmatpush1.bf16.xpose.msra.mxu0 0
    %1103 = vmatprep.subr.bf16.mxu0 0
    %1104 = vmatpush1.bf16.xpose.msra.mxu0 0
    %1105 = vmatprep.subr.bf16.mxu0 0
    %1106 = vmatpush1.bf16.xpose.msra.mxu0 0
    %1107 = vmatprep.subr.bf16.mxu0 0
    %1108 = vmatpush1.bf16.xpose.msra.mxu0 0
    %1109 = vmatprep.subr.bf16.mxu0 0
    %1110 = vmatpush1.bf16.xpose.msra.mxu0 0
    %1111 = vmatprep.mubr.bf16.mxu0 0
    %1112 = vmatmul.mubr.bf16.gmra.mrb[0].mxu0 %v1074
    %v1113 = vpop.f32.mrb[0].mxu0
    %v1114 = vadd.f32 %v164, %v1113
    %v1115 = vpop.f32.mrb[0].mxu0
    %v1116 = vpop.f32.mrb[0].mxu0
    %v1117 = vadd.f32 %v165, %v1116
    %v1118 = vpop.f32.mrb[0].mxu0
    %1119 = vdwg.mxu0
    %v1120 = vsel %vm280, %v1114, -inf
    %1121 = vmax.xlane.f32.xlu0 %v1120
    %v1122 = vpop.xlane.xlu0 %1121
    %v1123 = vsel %vm280, %v1117, -inf
    %1124 = vmax.xlane.f32.xlu0 %v1123
    %v1125 = vpop.xlane.xlu0 %1124
    %v1126 = vsub.f32 %v1114, %v1122
    %v1127 = vsub.f32 %v1117, %v1125
    %v1128 = vmul.f32 %v1126, 1.442695
    %v1129 = vpow.pop %v1128
    %v1130 = vmul.f32 %v1127, 1.442695
    %v1131 = vpow.pop %v1130
    %v1132 = vsel %vm280, %v1129, 0.0
    %1133 = vadd.xlane.f32.xlu0 %v1132
    %v1134 = vpop.xlane.xlu0 %1133
    %v1135 = vsel %vm280, %v1131, 0.0
    %1136 = vadd.xlane.f32.xlu0 %v1135
    %v1137 = vpop.xlane.xlu0 %1136
    %v1138 = vrcp.pop %v1134
    %v1139 = vrcp.pop %v1137
    %v1140 = vmul.f32 %v1129, %v1138
    %v1141 = vmul.f32 %v1131, %v1139
    %v1142 = vpack.c.bf16 %v1141, %v1140
    %1143 = vrot.lane.b32.xlu0 %v942, 48
    %v1144 = vpop.permute.xlu0 %1143
    %v1147 = vsel %vm280, %v1142, 0
    %1149 = vmatprep.subr.bf16.mxu0 0
    %1150 = vmatpush1.bf16.msra.mxu0 %v1144
    %1151 = vmatprep.subr.bf16.mxu0 0
    %1152 = vmatpush1.bf16.msra.mxu0 0
    %1153 = vmatprep.subr.bf16.mxu0 0
    %1154 = vmatpush1.bf16.msra.mxu0 0
    %1155 = vmatprep.subr.bf16.mxu0 0
    %1156 = vmatpush1.bf16.msra.mxu0 0
    %1157 = vmatprep.subr.bf16.mxu0 0
    %1158 = vmatpush1.bf16.msra.mxu0 0
    %1159 = vmatprep.subr.bf16.mxu0 0
    %1160 = vmatpush1.bf16.msra.mxu0 0
    %1161 = vmatprep.subr.bf16.mxu0 0
    %1162 = vmatpush1.bf16.msra.mxu0 0
    %1163 = vmatprep.subr.bf16.mxu0 0
    %1164 = vmatpush1.bf16.msra.mxu0 0
    %1165 = vmatprep.subr.bf16.mxu0 0
    %1166 = vmatpush1.bf16.msra.mxu0 0
    %1167 = vmatprep.subr.bf16.mxu0 0
    %1168 = vmatpush1.bf16.msra.mxu0 0
    %1169 = vmatprep.subr.bf16.mxu0 0
    %1170 = vmatpush1.bf16.msra.mxu0 0
    %1171 = vmatprep.subr.bf16.mxu0 0
    %1172 = vmatpush1.bf16.msra.mxu0 0
    %1173 = vmatprep.subr.bf16.mxu0 0
    %1174 = vmatpush1.bf16.msra.mxu0 0
    %1175 = vmatprep.subr.bf16.mxu0 0
    %1176 = vmatpush1.bf16.msra.mxu0 0
    %1177 = vmatprep.subr.bf16.mxu0 0
    %1178 = vmatpush1.bf16.msra.mxu0 0
    %1179 = vmatprep.subr.bf16.mxu0 0
    %1180 = vmatpush1.bf16.msra.mxu0 0
    %1181 = vmatprep.mubr.bf16.mxu0 0
    %1182 = vmatmul.mubr.bf16.gmra.mrb[0].mxu0 %v1147
    %v1183 = vpop.f32.mrb[0].mxu0
    %v1184 = vadd.f32 0.0, %v1183
    %v1185 = vpop.f32.mrb[0].mxu0
    %v1186 = vpop.f32.mrb[0].mxu0
    %v1187 = vadd.f32 0.0, %v1186
    %v1188 = vpop.f32.mrb[0].mxu0
    %1189 = vdwg.mxu0
    %v1190 = vpack.c.bf16 %v1187, %v1184
    %s1191 = scalar_lea.vmem %s6, 24
    %v1192 = vld [vmem:[%s1191] sm:$0xf]
    %v1193 = vld [vmem:[%s1191 + $0x4] sm:$0xf]
    %v1196 = vunpack.c.l.b16 %v1192
    %v1197 = vunpack.c.l.b16 %v1193
    %v1198 = vpack.c.b16 %v1197, %v1196
    %v1201 = vsel %vm280, %v1190, 0
    %1203 = vmatprep.subr.bf16.mxu0 0
    %1204 = vmatpush1.bf16.msra.mxu0 %v1198
    %1205 = vmatprep.subr.bf16.mxu0 0
    %1206 = vmatpush1.bf16.msra.mxu0 0
    %1207 = vmatprep.subr.bf16.mxu0 0
    %1208 = vmatpush1.bf16.msra.mxu0 0
    %1209 = vmatprep.subr.bf16.mxu0 0
    %1210 = vmatpush1.bf16.msra.mxu0 0
    %1211 = vmatprep.subr.bf16.mxu0 0
    %1212 = vmatpush1.bf16.msra.mxu0 0
    %1213 = vmatprep.subr.bf16.mxu0 0
    %1214 = vmatpush1.bf16.msra.mxu0 0
    %1215 = vmatprep.subr.bf16.mxu0 0
    %1216 = vmatpush1.bf16.msra.mxu0 0
    %1217 = vmatprep.subr.bf16.mxu0 0
    %1218 = vmatpush1.bf16.msra.mxu0 0
    %1219 = vmatprep.subr.bf16.mxu0 0
    %1220 = vmatpush1.bf16.msra.mxu0 0
    %1221 = vmatprep.subr.bf16.mxu0 0
    %1222 = vmatpush1.bf16.msra.mxu0 0
    %1223 = vmatprep.subr.bf16.mxu0 0
    %1224 = vmatpush1.bf16.msra.mxu0 0
    %1225 = vmatprep.subr.bf16.mxu0 0
    %1226 = vmatpush1.bf16.msra.mxu0 0
    %1227 = vmatprep.subr.bf16.mxu0 0
    %1228 = vmatpush1.bf16.msra.mxu0 0
    %1229 = vmatprep.subr.bf16.mxu0 0
    %1230 = vmatpush1.bf16.msra.mxu0 0
    %1231 = vmatprep.subr.bf16.mxu0 0
    %1232 = vmatpush1.bf16.msra.mxu0 0
    %1233 = vmatprep.subr.bf16.mxu0 0
    %1234 = vmatpush1.bf16.msra.mxu0 0
    %1235 = vmatprep.mubr.bf16.mxu0 0
    %1236 = vmatmul.mubr.bf16.gmra.mrb[0].mxu0 %v1201
    %v1237 = vpop.f32.mrb[0].mxu0
    %v1238 = vadd.f32 0.0, %v1237
    %v1239 = vpop.f32.mrb[0].mxu0
    %v1240 = vpop.f32.mrb[0].mxu0
    %v1241 = vadd.f32 0.0, %v1240
    %v1242 = vpop.f32.mrb[0].mxu0
    %1243 = vdwg.mxu0
    %v1246 = vunpack.c.l.b16 %v1066
    %v1247 = vunpack.c.l.b16 %v1067
    %v1248 = vpack.c.b16 %v1247, %v1246
    %v1251 = vsel %vm280, %v1064, 0
    %1253 = vmatprep.subr.bf16.mxu0 0
    %1254 = vmatpush1.bf16.msra.mxu0 %v1248
    %1255 = vmatprep.subr.bf16.mxu0 0
    %1256 = vmatpush1.bf16.msra.mxu0 0
    %1257 = vmatprep.subr.bf16.mxu0 0
    %1258 = vmatpush1.bf16.msra.mxu0 0
    %1259 = vmatprep.subr.bf16.mxu0 0
    %1260 = vmatpush1.bf16.msra.mxu0 0
    %1261 = vmatprep.subr.bf16.mxu0 0
    %1262 = vmatpush1.bf16.msra.mxu0 0
    %1263 = vmatprep.subr.bf16.mxu0 0
    %1264 = vmatpush1.bf16.msra.mxu0 0
    %1265 = vmatprep.subr.bf16.mxu0 0
    %1266 = vmatpush1.bf16.msra.mxu0 0
    %1267 = vmatprep.subr.bf16.mxu0 0
    %1268 = vmatpush1.bf16.msra.mxu0 0
    %1269 = vmatprep.subr.bf16.mxu0 0
    %1270 = vmatpush1.bf16.msra.mxu0 0
    %1271 = vmatprep.subr.bf16.mxu0 0
    %1272 = vmatpush1.bf16.msra.mxu0 0
    %1273 = vmatprep.subr.bf16.mxu0 0
    %1274 = vmatpush1.bf16.msra.mxu0 0
    %1275 = vmatprep.subr.bf16.mxu0 0
    %1276 = vmatpush1.bf16.msra.mxu0 0
    %1277 = vmatprep.subr.bf16.mxu0 0
    %1278 = vmatpush1.bf16.msra.mxu0 0
    %1279 = vmatprep.subr.bf16.mxu0 0
    %1280 = vmatpush1.bf16.msra.mxu0 0
    %1281 = vmatprep.subr.bf16.mxu0 0
    %1282 = vmatpush1.bf16.msra.mxu0 0
    %1283 = vmatprep.subr.bf16.mxu0 0
    %1284 = vmatpush1.bf16.msra.mxu0 0
    %1285 = vmatprep.mubr.bf16.mxu0 0
    %1286 = vmatmul.mubr.bf16.gmra.mrb[0].mxu0 %v1251
    %v1287 = vpop.f32.mrb[0].mxu0
    %v1288 = vadd.f32 %v1238, %v1287
    %v1289 = vpop.f32.mrb[0].mxu0
    %v1290 = vpop.f32.mrb[0].mxu0
    %v1291 = vadd.f32 %v1241, %v1290
    %v1292 = vpop.f32.mrb[0].mxu0
    %1293 = vdwg.mxu0
    %v1294 = vadd.f32 %v830, %v1288
    %v1295 = vadd.f32 %v831, %v1291
    %s1296 = scalar_lea.vmem %s7, 1
    %v1297 = vld [vmem:[%s1296] sm:$0x1]
    %s1298 = scalar_lea.vmem %s8, 1
    %v1299 = vld [vmem:[%s1298] sm:$0x1]
    %v1300 = vsel %vm168, %v1294, 0.0
    %1301 = vadd.xlane.f32.xlu0 %v1300
    %v1302 = vpop.xlane.xlu0 %1301
    %v1303 = vsel %vm168, %v1295, 0.0
    %1304 = vadd.xlane.f32.xlu0 %v1303
    %v1305 = vpop.xlane.xlu0 %1304
    %v1306 = vmul.f32 %v1302, %v175
    %v1307 = vmul.f32 %v1305, %v175
    %v1308 = vsub.f32 %v1294, %v1306
    %v1309 = vsub.f32 %v1295, %v1307
    %v1310 = vmul.f32 %v1308, %v1308
    %v1311 = vmul.f32 %v1309, %v1309
    %v1312 = vsel %vm168, %v1310, 0.0
    %1313 = vadd.xlane.f32.xlu0 %v1312
    %v1314 = vpop.xlane.xlu0 %1313
    %v1315 = vsel %vm168, %v1311, 0.0
    %1316 = vadd.xlane.f32.xlu0 %v1315
    %v1317 = vpop.xlane.xlu0 %1316
    %v1318 = vmul.f32 %v1314, %v175
    %v1319 = vmul.f32 %v1317, %v175
    %v1320 = vadd.f32 %v1318, 1e-05
    %v1321 = vadd.f32 %v1319, 1e-05
    %v1322 = vrsqrt.pop %v1320
    %v1323 = vrsqrt.pop %v1321
    %v1324 = vmul.f32 %v1308, %v1322
    %v1325 = vmul.f32 %v1309, %v1323
    %v1327 = vlaneseq
    %v1328 = vshrl.u32 %v1327, 7
    %v1329 = vsub.s32 0, %v1328
    %v1330 = vrot.slane %v1297, %v1329
    %v1332 = vmul.f32 %v1324, %v1330
    %v1333 = vmul.f32 %v1325, %v1330
    %v1335 = vlaneseq
    %v1336 = vshrl.u32 %v1335, 7
    %v1337 = vsub.s32 0, %v1336
    %v1338 = vrot.slane %v1299, %v1337
    %v1340 = vadd.f32 %v1332, %v1338
    %v1341 = vadd.f32 %v1333, %v1338
    %v1342 = vpack.c.bf16 %v1341, %v1340
    %s1343 = scalar_lea.vmem %s9, 16
    %v1344 = vld [vmem:[%s1343] sm:$0xf]
    %v1345 = vld [vmem:[%s1343 + $0x4] sm:$0xf]
    %v1346 = vld [vmem:[%s1343 + $0x8] sm:$0xf]
    %v1347 = vld [vmem:[%s1343 + $0xc] sm:$0xf]
    %v1352 = vunpack.c.l.b16 %v1344
    %v1353 = vunpack.c.l.b16 %v1345
    %v1354 = vunpack.c.l.b16 %v1346
    %v1355 = vunpack.c.l.b16 %v1347
    %v1356 = vpack.c.b16 %v1353, %v1352
    %v1357 = vpack.c.b16 %v1355, %v1354
    %v1361 = vsel %vm168, %v1342, 0
    %1363 = vmatprep.subr.bf16.mxu0 0
    %1364 = vmatpush1.bf16.msra.mxu0 %v1356
    %1365 = vmatprep.subr.bf16.mxu0 0
    %1366 = vmatpush1.bf16.msra.mxu0 %v1357
    %1367 = vmatprep.subr.bf16.mxu0 0
    %1368 = vmatpush1.bf16.msra.mxu0 0
    %1369 = vmatprep.subr.bf16.mxu0 0
    %1370 = vmatpush1.bf16.msra.mxu0 0
    %1371 = vmatprep.subr.bf16.mxu0 0
    %1372 = vmatpush1.bf16.msra.mxu0 0
    %1373 = vmatprep.subr.bf16.mxu0 0
    %1374 = vmatpush1.bf16.msra.mxu0 0
    %1375 = vmatprep.subr.bf16.mxu0 0
    %1376 = vmatpush1.bf16.msra.mxu0 0
    %1377 = vmatprep.subr.bf16.mxu0 0
    %1378 = vmatpush1.bf16.msra.mxu0 0
    %1379 = vmatprep.subr.bf16.mxu0 0
    %1380 = vmatpush1.bf16.msra.mxu0 0
    %1381 = vmatprep.subr.bf16.mxu0 0
    %1382 = vmatpush1.bf16.msra.mxu0 0
    %1383 = vmatprep.subr.bf16.mxu0 0
    %1384 = vmatpush1.bf16.msra.mxu0 0
    %1385 = vmatprep.subr.bf16.mxu0 0
    %1386 = vmatpush1.bf16.msra.mxu0 0
    %1387 = vmatprep.subr.bf16.mxu0 0
    %1388 = vmatpush1.bf16.msra.mxu0 0
    %1389 = vmatprep.subr.bf16.mxu0 0
    %1390 = vmatpush1.bf16.msra.mxu0 0
    %1391 = vmatprep.subr.bf16.mxu0 0
    %1392 = vmatpush1.bf16.msra.mxu0 0
    %1393 = vmatprep.subr.bf16.mxu0 0
    %1394 = vmatpush1.bf16.msra.mxu0 0
    %1395 = vmatprep.mubr.bf16.mxu0 0
    %1396 = vmatmul.mubr.bf16.gmra.mrb[0].mxu0 %v1361
    %v1397 = vpop.f32.mrb[0].mxu0
    %v1398 = vadd.f32 0.0, %v1397
    %v1399 = vpop.f32.mrb[0].mxu0
    %v1400 = vpop.f32.mrb[0].mxu0
    %v1401 = vadd.f32 0.0, %v1400
    %v1402 = vpop.f32.mrb[0].mxu0
    %1403 = vdwg.mxu0
    %v1404 = vmul.f32 %v1398, %v1398
    %v1405 = vmul.f32 %v1401, %v1401
    %v1406 = vmul.f32 %v1398, %v1404
    %v1407 = vmul.f32 %v1401, %v1405
    %v1408 = vmul.f32 %v1406, 0.044715
    %v1409 = vmul.f32 %v1407, 0.044715
    %v1410 = vadd.f32 %v1398, %v1408
    %v1411 = vadd.f32 %v1401, %v1409
    %v1412 = vmul.f32 %v1410, 0.7978846
    %v1413 = vmul.f32 %v1411, 0.7978846
    %v1414 = vtanh.pop %v1412
    %v1415 = vtanh.pop %v1413
    %v1416 = vadd.f32 %v1414, 1.0
    %v1417 = vadd.f32 %v1415, 1.0
    %v1418 = vmul.f32 %v1416, 0.5
    %v1419 = vmul.f32 %v1417, 0.5
    %v1420 = vmul.f32 %v1398, %v1418
    %v1421 = vmul.f32 %v1401, %v1419
    %v1422 = vpack.c.bf16 %v1421, %v1420
    %s1423 = scalar_lea.vmem %s10, 32
    %v1424 = vld [vmem:[%s1423] sm:$0xf]
    %v1425 = vld [vmem:[%s1423 + $0x4] sm:$0xf]
    %v1426 = vld [vmem:[%s1423 + $0x8] sm:$0xf]
    %v1427 = vld [vmem:[%s1423 + $0xc] sm:$0xf]
    %v1428 = vld [vmem:[%s1423 + $0x10] sm:$0xf]
    %v1429 = vld [vmem:[%s1423 + $0x14] sm:$0xf]
    %v1430 = vld [vmem:[%s1423 + $0x18] sm:$0xf]
    %v1431 = vld [vmem:[%s1423 + $0x1c] sm:$0xf]
    %v1440 = vunpack.c.l.b16 %v1424
    %v1441 = vunpack.c.l.b16 %v1425
    %v1442 = vunpack.c.l.b16 %v1426
    %v1443 = vunpack.c.l.b16 %v1427
    %v1444 = vunpack.c.l.b16 %v1428
    %v1445 = vunpack.c.l.b16 %v1429
    %v1446 = vunpack.c.l.b16 %v1430
    %v1447 = vunpack.c.l.b16 %v1431
    %v1448 = vpack.c.b16 %v1441, %v1440
    %v1449 = vpack.c.b16 %v1443, %v1442
    %v1450 = vpack.c.b16 %v1445, %v1444
    %v1451 = vpack.c.b16 %v1447, %v1446
    %v1457 = vsel %vm785, %v1422, 0
    %1459 = vmatprep.subr.bf16.mxu0 0
    %1460 = vmatpush1.bf16.msra.mxu0 %v1448
    %1461 = vmatprep.subr.bf16.mxu0 0
    %1462 = vmatpush1.bf16.msra.mxu0 %v1449
    %1463 = vmatprep.subr.bf16.mxu0 0
    %1464 = vmatpush1.bf16.msra.mxu0 %v1450
    %1465 = vmatprep.subr.bf16.mxu0 0
    %1466 = vmatpush1.bf16.msra.mxu0 %v1451
    %1467 = vmatprep.subr.bf16.mxu0 0
    %1468 = vmatpush1.bf16.msra.mxu0 0
    %1469 = vmatprep.subr.bf16.mxu0 0
    %1470 = vmatpush1.bf16.msra.mxu0 0
    %1471 = vmatprep.subr.bf16.mxu0 0
    %1472 = vmatpush1.bf16.msra.mxu0 0
    %1473 = vmatprep.subr.bf16.mxu0 0
    %1474 = vmatpush1.bf16.msra.mxu0 0
    %1475 = vmatprep.subr.bf16.mxu0 0
    %1476 = vmatpush1.bf16.msra.mxu0 0
    %1477 = vmatprep.subr.bf16.mxu0 0
    %1478 = vmatpush1.bf16.msra.mxu0 0
    %1479 = vmatprep.subr.bf16.mxu0 0
    %1480 = vmatpush1.bf16.msra.mxu0 0
    %1481 = vmatprep.subr.bf16.mxu0 0
    %1482 = vmatpush1.bf16.msra.mxu0 0
    %1483 = vmatprep.subr.bf16.mxu0 0
    %1484 = vmatpush1.bf16.msra.mxu0 0
    %1485 = vmatprep.subr.bf16.mxu0 0
    %1486 = vmatpush1.bf16.msra.mxu0 0
    %1487 = vmatprep.subr.bf16.mxu0 0
    %1488 = vmatpush1.bf16.msra.mxu0 0
    %1489 = vmatprep.subr.bf16.mxu0 0
    %1490 = vmatpush1.bf16.msra.mxu0 0
    %1491 = vmatprep.mubr.bf16.mxu0 0
    %1492 = vmatmul.mubr.bf16.gmra.mrb[0].mxu0 %v1457
    %v1493 = vpop.f32.mrb[0].mxu0
    %v1494 = vadd.f32 0.0, %v1493
    %v1495 = vpop.f32.mrb[0].mxu0
    %v1496 = vpop.f32.mrb[0].mxu0
    %v1497 = vadd.f32 0.0, %v1496
    %v1498 = vpop.f32.mrb[0].mxu0
    %1499 = vdwg.mxu0
    %v1500 = vadd.f32 %v1294, %v1494
    %v1501 = vadd.f32 %v1295, %v1497
    %v1502 = vld [vmem:[%s11] sm:$0x1]
    %v1503 = vld [vmem:[%s12] sm:$0x1]
    %v1504 = vsel %vm168, %v1500, 0.0
    %1505 = vadd.xlane.f32.xlu0 %v1504
    %v1506 = vpop.xlane.xlu0 %1505
    %v1507 = vsel %vm168, %v1501, 0.0
    %1508 = vadd.xlane.f32.xlu0 %v1507
    %v1509 = vpop.xlane.xlu0 %1508
    %v1510 = vmul.f32 %v1506, %v175
    %v1511 = vmul.f32 %v1509, %v175
    %v1512 = vsub.f32 %v1500, %v1510
    %v1513 = vsub.f32 %v1501, %v1511
    %v1514 = vmul.f32 %v1512, %v1512
    %v1515 = vmul.f32 %v1513, %v1513
    %v1516 = vsel %vm168, %v1514, 0.0
    %1517 = vadd.xlane.f32.xlu0 %v1516
    %v1518 = vpop.xlane.xlu0 %1517
    %v1519 = vsel %vm168, %v1515, 0.0
    %1520 = vadd.xlane.f32.xlu0 %v1519
    %v1521 = vpop.xlane.xlu0 %1520
    %v1522 = vmul.f32 %v1518, %v175
    %v1523 = vmul.f32 %v1521, %v175
    %v1524 = vadd.f32 %v1522, 1e-05
    %v1525 = vadd.f32 %v1523, 1e-05
    %v1526 = vrsqrt.pop %v1524
    %v1527 = vrsqrt.pop %v1525
    %v1528 = vmul.f32 %v1512, %v1526
    %v1529 = vmul.f32 %v1513, %v1527
    %v1531 = vlaneseq
    %v1532 = vshrl.u32 %v1531, 7
    %v1533 = vsub.s32 0, %v1532
    %v1534 = vrot.slane %v1502, %v1533
    %v1536 = vmul.f32 %v1528, %v1534
    %v1537 = vmul.f32 %v1529, %v1534
    %v1539 = vlaneseq
    %v1540 = vshrl.u32 %v1539, 7
    %v1541 = vsub.s32 0, %v1540
    %v1542 = vrot.slane %v1503, %v1541
    %v1544 = vadd.f32 %v1536, %v1542
    %v1545 = vadd.f32 %v1537, %v1542
    %vm1546 = vcmask 253952
    %1547 = vst.msk [vmem:[#allocation2] sm:$0x1] %vm1546, %v1544
    %1548 = vst.msk [vmem:[#allocation2 + $0x1] sm:$0x1] %vm1546, %v1545
    // Predicated region
    $region54: #{tpu_custom_call.1} parent=1 // pred_check
      _
    $region55: #{tpu_custom_call.1} parent=1 // pred_check_branch
      %1550 = sbr.rel (0) target = $region57
    $region56: #{tpu_custom_call.1} parent=1 // pred_region
      %s1552 = ssub.s32 32, 32
      %1553 = vsyncadd [#allocation3], %s1552
      %s1555 = sshll.u32 [#allocation2], 4
      %s1556 = int_to_ptr.vmem [resolvable:$true] %s1555
      %1558 = dma.vmem_to_hbm [thread:$0]  %s1556, 32, %s13, [#allocation3]
    $region57: #{tpu_custom_call.1} parent=1 // pred_fallthru
      _
    // Predicated region
    $region58: #{tpu_custom_call.1} parent=1 // pred_check
      _
    $region59: #{tpu_custom_call.1} parent=1 // pred_check_branch
      %1560 = sbr.rel (0) target = $region61
    $region60: #{tpu_custom_call.1} parent=1 // pred_region
      %1561 = dma.done [#allocation3], 32
    $region61: #{tpu_custom_call.1} parent=1 // pred_fallthru
      _
    %1562 = vsyncpa [#allocation3], 1

</llo_original>
